<compile_context>
chip_gen: v6e
topology: v6e:2x2x1
jax: 0.10.0
libtpu: 0.0.40
codegen_flags: <defaults>
</compile_context>

<pallas_src>
import jax
import jax.numpy as jnp
from jax.experimental import pallas as pl
from jax.experimental.pallas import tpu as pltpu

# Tap order k = (dh+1)*3 + (dw+1), matching OIHW weight[:, :, dh+1, dw+1].
_TAPS = tuple((dh, dw) for dh in (-1, 0, 1) for dw in (-1, 0, 1))


def _fold_bn(w, b, gamma, beta, mean, var, eps=1e-5):
    """Fold eval-mode BatchNorm into the preceding conv (OIHW weight, (O,) bias)."""
    scale = gamma / jnp.sqrt(var + eps)                      # (C_out,)
    w_eff = w * scale[:, None, None, None]
    b_eff = (b - mean) * scale + beta
    return w_eff, b_eff


def _stack_taps(w, b, g, be, m, v):
    """Fold BN; reshape OIHW -> (C_out, 9*C_out) matching the kernel's
    tap-major / input-channel-minor stacked-activation layout."""
    w_eff, b_eff = _fold_bn(w, b, g, be, m, v)               # (O, I, 3, 3), (O,)
    O, I = w_eff.shape[0], w_eff.shape[1]
    w_st = jnp.transpose(w_eff, (0, 2, 3, 1)).reshape(O, 9 * I)
    return w_st, b_eff.reshape(O, 1)


def _boundary_masks(H, W, chunk):
    """(9, 1, chunk*H*W) 0/1 masks implementing zero padding for each 3x3 tap,
    tiled per image so lane-roll wraparound across images is always zeroed."""
    p = jnp.arange(chunk * H * W, dtype=jnp.int32) % (H * W)
    row, col = p // W, p % W
    ms = []
    for dh, dw in _TAPS:
        ok = ((row + dh >= 0) & (row + dh < H) &
              (col + dw >= 0) & (col + dw < W))
        ms.append(ok.astype(jnp.float32))
    return jnp.stack(ms).reshape(len(_TAPS), 1, chunk * H * W)


def _pick_chunk(n):
    """Largest images-per-step dividing n while keeping grid length >= 2 (v7x)."""
    if n < 2:
        return max(n, 1)
    best = 1
    for d in range(1, n // 2 + 1):
        if n % d == 0:
            best = d
    return best


def rrcnn_block(x, params, *, t=2, images_per_step=None, mxu_dtype=jnp.float32):
    """x: (N, C_in, H, W) NCHW -> (N, C_out, H, W). Eval-mode forward pass."""
    N, C_in, H, W = x.shape
    HW = H * W
    C_out = params["w0"].shape[0]

    chunk = images_per_step if images_per_step is not None else _pick_chunk(N)
    if N % chunk != 0 or (chunk * HW) % 128 != 0:
        chunk = N                                            # full-batch fallback (block == full dim)
    lanes = chunk * HW
    grid_len = N // chunk

    # ---- host-side weight prep (runs once under jit) ----
    w0 = params["w0"].reshape(C_out, C_in)                   # 1x1 conv
    b0 = params["b0"].reshape(C_out, 1)
    w1, b1 = _stack_taps(params["w1"], params["b1"], params["gamma1"],
                         params["beta1"], params["mean1"], params["var1"])
    w2, b2 = _stack_taps(params["w2"], params["b2"], params["gamma2"],
                         params["beta2"], params["mean2"], params["var2"])
    w12 = jnp.stack([w1, w2])                                # (2, C_out, 9*C_out)
    b12 = jnp.stack([b1, b2])                                # (2, C_out, 1)
    masks = _boundary_masks(H, W, chunk)                     # (9, 1, lanes) f32

    # Batch fused into lanes: (N, C, H, W) -> (C, N*HW).
    x2d = jnp.transpose(x.reshape(N, C_in, HW), (1, 0, 2)).reshape(C_in, N * HW)

    def kernel(x_ref, m_ref, w0_ref, b0_ref, w12_ref, b12_ref, o_ref):
        f32 = jnp.float32
        # Hoisted: load the 9 per-tap boundary masks once per grid step.
        msk = [m_ref[k] for k in range(len(_TAPS))]          # each (1, lanes)

        def conv_bn_relu(a, w, b):
            # a: (C_out, lanes) f32.  3x3 conv = ONE stacked matmul, K = 9*C_out.
            parts = []
            for k, (dh, dw) in enumerate(_TAPS):
                s = dh * W + dw
                sh = a if s == 0 else pltpu.roll(a, (-s) % lanes, axis=1)
                parts.append(sh * msk[k])                    # zero-pad via mask
            stacked = jnp.concatenate(parts, axis=0)         # (9*C_out, lanes)
            acc = jnp.dot(w.astype(mxu_dtype), stacked.astype(mxu_dtype),
                          preferred_element_type=f32)
            return jnp.maximum(acc + b, 0.0)                 # folded-BN bias + ReLU

        def recurrent(a, w, b):
            x1 = None
            for i in range(t):                               # mirrors Recurrent_block.forward
                if i == 0:
                    x1 = conv_bn_relu(a, w, b)
                x1 = conv_bn_relu(a + x1, w, b)
            return x1

        # Weights loaded once per grid step.
        w0v, b0v = w0_ref[...], b0_ref[...]
        w1v, b1v = w12_ref[0], b12_ref[0]
        w2v, b2v = w12_ref[1], b12_ref[1]

        xx = x_ref[...].astype(f32)                          # (C_in, lanes)
        y = jnp.dot(w0v.astype(mxu_dtype), xx.astype(mxu_dtype),
                    preferred_element_type=f32) + b0v        # 1x1 conv + bias
        r = recurrent(y, w1v, b1v)
        r = recurrent(r, w2v, b2v)
        o_ref[...] = (y + r).astype(o_ref.dtype)             # residual

    out2d = pl.pallas_call(
        kernel,
        out_shape=jax.ShapeDtypeStruct((C_out, N * HW), x.dtype),
        grid_spec=pltpu.PrefetchScalarGridSpec(
            num_scalar_prefetch=0,
            grid=(grid_len,),
            in_specs=[
                pl.BlockSpec((C_in, lanes), lambda g: (0, g)),            # x chunk (lane-dense)
                pl.BlockSpec((len(_TAPS), 1, lanes), lambda g: (0, 0, 0)),# tap masks
                pl.BlockSpec((C_out, C_in), lambda g: (0, 0)),            # w0 (1x1)
                pl.BlockSpec((C_out, 1), lambda g: (0, 0)),               # b0
                pl.BlockSpec((2, C_out, 9 * C_out), lambda g: (0, 0, 0)), # w1/w2 stacked, BN folded
                pl.BlockSpec((2, C_out, 1), lambda g: (0, 0, 0)),         # b1/b2
            ],
            out_specs=pl.BlockSpec((C_out, lanes), lambda g: (0, g)),
        ),
        compiler_params=pltpu.CompilerParams(
            dimension_semantics=("parallel",)),
    )(x2d, masks, w0, b0, w12, b12)

    return out2d.reshape(C_out, N, HW).transpose(1, 0, 2).reshape(N, C_out, H, W)


def init_params(key, C_in, C_out):
    ks = jax.random.split(key, 14)

    def bn_params(a, b, c, d):
        return (1.0 + 0.1 * jax.random.normal(ks[a], (C_out,), jnp.float32),   # gamma
                0.1 * jax.random.normal(ks[b], (C_out,), jnp.float32),          # beta
                0.1 * jax.random.normal(ks[c], (C_out,), jnp.float32),          # running mean
                jnp.abs(1.0 + 0.1 * jax.random.normal(ks[d], (C_out,), jnp.float32)))  # running var

    g1, be1, m1, v1 = bn_params(4, 5, 6, 7)
    g2, be2, m2, v2 = bn_params(10, 11, 12, 13)
    return {
        "w0": 0.3 * jax.random.normal(ks[0], (C_out, C_in, 1, 1), jnp.float32),
        "b0": 0.1 * jax.random.normal(ks[1], (C_out,), jnp.float32),
        "w1": 0.1 * jax.random.normal(ks[2], (C_out, C_out, 3, 3), jnp.float32),
        "b1": 0.1 * jax.random.normal(ks[3], (C_out,), jnp.float32),
        "gamma1": g1, "beta1": be1, "mean1": m1, "var1": v1,
        "w2": 0.1 * jax.random.normal(ks[8], (C_out, C_out, 3, 3), jnp.float32),
        "b2": 0.1 * jax.random.normal(ks[9], (C_out,), jnp.float32),
        "gamma2": g2, "beta2": be2, "mean2": m2, "var2": v2,
    }


def reference(x, params, *, t=2, eps=1e-5):
    """Pure-JAX (XLA) eval-mode reference of the same forward pass."""
    def conv(a, w, b, pad):
        out = jax.lax.conv_general_dilated(
            a, w, window_strides=(1, 1), padding=pad,
            dimension_numbers=("NCHW", "OIHW", "NCHW"))
        return out + b[None, :, None, None]

    def bn(a, g, be, m, v):
        return (g[None, :, None, None] * (a - m[None, :, None, None])
                / jnp.sqrt(v[None, :, None, None] + eps) + be[None, :, None, None])

    def rec_block(a, w, b, g, be, m, v):
        f = lambda z: jnp.maximum(bn(conv(z, w, b, "SAME"), g, be, m, v), 0.0)
        x1 = None
        for i in range(t):
            if i == 0:
                x1 = f(a)
            x1 = f(a + x1)
        return x1

    y = conv(x, params["w0"], params["b0"], "VALID")          # 1x1 conv + bias
    r1 = rec_block(y, params["w1"], params["b1"], params["gamma1"],
                   params["beta1"], params["mean1"], params["var1"])
    r2 = rec_block(r1, params["w2"], params["b2"], params["gamma2"],
                   params["beta2"], params["mean2"], params["var2"])
    return y + r2


if __name__ == "__main__":
    C_in, C_out, t = 4, 8, 2
    N, H, W = 2, 16, 16

    key = jax.random.PRNGKey(0)
    kx, kp = jax.random.split(key)
    x = jax.random.normal(kx, (N, C_in, H, W), jnp.float32)
    params = init_params(kp, C_in, C_out)

    out = jax.block_until_ready(rrcnn_block(x, params, t=t))
    ref = reference(x, params, t=t)

    assert out.shape == (N, C_out, H, W)
    err = float(jnp.max(jnp.abs(out - ref)))
    assert err < 1e-3, f"mismatch vs reference: max abs err = {err}"
    print("KERNEL_OK")
</pallas_src>

<mosaic_0001>
module attributes {stable_mosaic.version = 11 : i64} {
  func.func @kernel(%arg0: i32, %arg1: memref<4x256xf32, #tpu.memory_space<vmem>>, %arg2: memref<9x1x256xf32, #tpu.memory_space<vmem>>, %arg3: memref<8x4xf32, #tpu.memory_space<vmem>>, %arg4: memref<8x1xf32, #tpu.memory_space<vmem>>, %arg5: memref<2x8x72xf32, #tpu.memory_space<vmem>>, %arg6: memref<2x8x1xf32, #tpu.memory_space<vmem>>, %arg7: memref<8x256xf32, #tpu.memory_space<vmem>>) attributes {dimension_semantics = [#tpu.dimension_semantics<parallel>], iteration_bounds = array<i64: 2>, scalar_prefetch = 0 : i64, scratch_operands = 0 : i64, tpu.core_type = #tpu.core_type<tc>, window_params = [{transform_indices = @transform_0, window_bounds = array<i64: 4, 256>}, {pipeline_mode = #tpu.pipeline_mode<synchronous>, transform_indices = @transform_1, window_bounds = array<i64: 9, 1, 256>}, {pipeline_mode = #tpu.pipeline_mode<synchronous>, transform_indices = @transform_2, window_bounds = array<i64: 8, 4>}, {pipeline_mode = #tpu.pipeline_mode<synchronous>, transform_indices = @transform_3, window_bounds = array<i64: 8, 1>}, {pipeline_mode = #tpu.pipeline_mode<synchronous>, transform_indices = @transform_4, window_bounds = array<i64: 2, 8, 72>}, {pipeline_mode = #tpu.pipeline_mode<synchronous>, transform_indices = @transform_5, window_bounds = array<i64: 2, 8, 1>}, {transform_indices = @transform_6, window_bounds = array<i64: 8, 256>}]} {
    %c0 = arith.constant 0 : index
    %c0_0 = arith.constant 0 : index
    %c0_1 = arith.constant 0 : index
    %0 = vector.load %arg2[%c0, %c0_0, %c0_1] : memref<9x1x256xf32, #tpu.memory_space<vmem>>, vector<1x1x256xf32>
    %1 = vector.shape_cast %0 : vector<1x1x256xf32> to vector<1x256xf32>
    %c1 = arith.constant 1 : index
    %c0_2 = arith.constant 0 : index
    %c0_3 = arith.constant 0 : index
    %2 = vector.load %arg2[%c1, %c0_2, %c0_3] : memref<9x1x256xf32, #tpu.memory_space<vmem>>, vector<1x1x256xf32>
    %3 = vector.shape_cast %2 : vector<1x1x256xf32> to vector<1x256xf32>
    %c2 = arith.constant 2 : index
    %c0_4 = arith.constant 0 : index
    %c0_5 = arith.constant 0 : index
    %4 = vector.load %arg2[%c2, %c0_4, %c0_5] : memref<9x1x256xf32, #tpu.memory_space<vmem>>, vector<1x1x256xf32>
    %5 = vector.shape_cast %4 : vector<1x1x256xf32> to vector<1x256xf32>
    %c3 = arith.constant 3 : index
    %c0_6 = arith.constant 0 : index
    %c0_7 = arith.constant 0 : index
    %6 = vector.load %arg2[%c3, %c0_6, %c0_7] : memref<9x1x256xf32, #tpu.memory_space<vmem>>, vector<1x1x256xf32>
    %7 = vector.shape_cast %6 : vector<1x1x256xf32> to vector<1x256xf32>
    %c4 = arith.constant 4 : index
    %c0_8 = arith.constant 0 : index
    %c0_9 = arith.constant 0 : index
    %8 = vector.load %arg2[%c4, %c0_8, %c0_9] : memref<9x1x256xf32, #tpu.memory_space<vmem>>, vector<1x1x256xf32>
    %9 = vector.shape_cast %8 : vector<1x1x256xf32> to vector<1x256xf32>
    %c5 = arith.constant 5 : index
    %c0_10 = arith.constant 0 : index
    %c0_11 = arith.constant 0 : index
    %10 = vector.load %arg2[%c5, %c0_10, %c0_11] : memref<9x1x256xf32, #tpu.memory_space<vmem>>, vector<1x1x256xf32>
    %11 = vector.shape_cast %10 : vector<1x1x256xf32> to vector<1x256xf32>
    %c6 = arith.constant 6 : index
    %c0_12 = arith.constant 0 : index
    %c0_13 = arith.constant 0 : index
    %12 = vector.load %arg2[%c6, %c0_12, %c0_13] : memref<9x1x256xf32, #tpu.memory_space<vmem>>, vector<1x1x256xf32>
    %13 = vector.shape_cast %12 : vector<1x1x256xf32> to vector<1x256xf32>
    %c7 = arith.constant 7 : index
    %c0_14 = arith.constant 0 : index
    %c0_15 = arith.constant 0 : index
    %14 = vector.load %arg2[%c7, %c0_14, %c0_15] : memref<9x1x256xf32, #tpu.memory_space<vmem>>, vector<1x1x256xf32>
    %15 = vector.shape_cast %14 : vector<1x1x256xf32> to vector<1x256xf32>
    %c8 = arith.constant 8 : index
    %c0_16 = arith.constant 0 : index
    %c0_17 = arith.constant 0 : index
    %16 = vector.load %arg2[%c8, %c0_16, %c0_17] : memref<9x1x256xf32, #tpu.memory_space<vmem>>, vector<1x1x256xf32>
    %17 = vector.shape_cast %16 : vector<1x1x256xf32> to vector<1x256xf32>
    %c0_18 = arith.constant 0 : index
    %c0_19 = arith.constant 0 : index
    %18 = vector.load %arg3[%c0_18, %c0_19] : memref<8x4xf32, #tpu.memory_space<vmem>>, vector<8x4xf32>
    %c0_20 = arith.constant 0 : index
    %c0_21 = arith.constant 0 : index
    %19 = vector.load %arg4[%c0_20, %c0_21] : memref<8x1xf32, #tpu.memory_space<vmem>>, vector<8x1xf32>
    %c0_22 = arith.constant 0 : index
    %c0_23 = arith.constant 0 : index
    %c0_24 = arith.constant 0 : index
    %20 = vector.load %arg5[%c0_22, %c0_23, %c0_24] : memref<2x8x72xf32, #tpu.memory_space<vmem>>, vector<1x8x72xf32>
    %21 = vector.shape_cast %20 : vector<1x8x72xf32> to vector<8x72xf32>
    %c0_25 = arith.constant 0 : index
    %c0_26 = arith.constant 0 : index
    %c0_27 = arith.constant 0 : index
    %22 = vector.load %arg6[%c0_25, %c0_26, %c0_27] : memref<2x8x1xf32, #tpu.memory_space<vmem>>, vector<1x8x1xf32>
    %23 = vector.shape_cast %22 : vector<1x8x1xf32> to vector<8x1xf32>
    %c1_28 = arith.constant 1 : index
    %c0_29 = arith.constant 0 : index
    %c0_30 = arith.constant 0 : index
    %24 = vector.load %arg5[%c1_28, %c0_29, %c0_30] : memref<2x8x72xf32, #tpu.memory_space<vmem>>, vector<1x8x72xf32>
    %25 = vector.shape_cast %24 : vector<1x8x72xf32> to vector<8x72xf32>
    %c1_31 = arith.constant 1 : index
    %c0_32 = arith.constant 0 : index
    %c0_33 = arith.constant 0 : index
    %26 = vector.load %arg6[%c1_31, %c0_32, %c0_33] : memref<2x8x1xf32, #tpu.memory_space<vmem>>, vector<1x8x1xf32>
    %27 = vector.shape_cast %26 : vector<1x8x1xf32> to vector<8x1xf32>
    %c0_34 = arith.constant 0 : index
    %c0_35 = arith.constant 0 : index
    %28 = vector.load %arg1[%c0_34, %c0_35] : memref<4x256xf32, #tpu.memory_space<vmem>>, vector<4x256xf32>
    %cst = arith.constant dense<0.000000e+00> : vector<8x256xf32>
    %29 = tpu.matmul %18, %28, %cst {dimension_numbers = #tpu.dot_dimension_numbers<[1], [0], [0], [1], [0, 0, 1, 1], [], []>} : vector<8x4xf32>, vector<4x256xf32>, vector<8x256xf32> -> vector<8x256xf32>
    %30 = vector.broadcast %19 : vector<8x1xf32> to vector<8x256xf32>
    %31 = arith.addf %29, %30 : vector<8x256xf32>
    %c17_i32 = arith.constant 17 : i32
    %32 = tpu.dynamic_rotate %31 by %c17_i32 dim 1 : vector<8x256xf32>, i32 -> vector<8x256xf32>
    %33 = vector.broadcast %1 : vector<1x256xf32> to vector<8x256xf32>
    %34 = arith.mulf %32, %33 : vector<8x256xf32>
    %c16_i32 = arith.constant 16 : i32
    %35 = tpu.dynamic_rotate %31 by %c16_i32 dim 1 : vector<8x256xf32>, i32 -> vector<8x256xf32>
    %36 = vector.broadcast %3 : vector<1x256xf32> to vector<8x256xf32>
    %37 = arith.mulf %35, %36 : vector<8x256xf32>
    %c15_i32 = arith.constant 15 : i32
    %38 = tpu.dynamic_rotate %31 by %c15_i32 dim 1 : vector<8x256xf32>, i32 -> vector<8x256xf32>
    %39 = vector.broadcast %5 : vector<1x256xf32> to vector<8x256xf32>
    %40 = arith.mulf %38, %39 : vector<8x256xf32>
    %c1_i32 = arith.constant 1 : i32
    %41 = tpu.dynamic_rotate %31 by %c1_i32 dim 1 : vector<8x256xf32>, i32 -> vector<8x256xf32>
    %42 = vector.broadcast %7 : vector<1x256xf32> to vector<8x256xf32>
    %43 = arith.mulf %41, %42 : vector<8x256xf32>
    %44 = vector.broadcast %9 : vector<1x256xf32> to vector<8x256xf32>
    %45 = arith.mulf %31, %44 : vector<8x256xf32>
    %c255_i32 = arith.constant 255 : i32
    %46 = tpu.dynamic_rotate %31 by %c255_i32 dim 1 : vector<8x256xf32>, i32 -> vector<8x256xf32>
    %47 = vector.broadcast %11 : vector<1x256xf32> to vector<8x256xf32>
    %48 = arith.mulf %46, %47 : vector<8x256xf32>
    %c241_i32 = arith.constant 241 : i32
    %49 = tpu.dynamic_rotate %31 by %c241_i32 dim 1 : vector<8x256xf32>, i32 -> vector<8x256xf32>
    %50 = vector.broadcast %13 : vector<1x256xf32> to vector<8x256xf32>
    %51 = arith.mulf %49, %50 : vector<8x256xf32>
    %c240_i32 = arith.constant 240 : i32
    %52 = tpu.dynamic_rotate %31 by %c240_i32 dim 1 : vector<8x256xf32>, i32 -> vector<8x256xf32>
    %53 = vector.broadcast %15 : vector<1x256xf32> to vector<8x256xf32>
    %54 = arith.mulf %52, %53 : vector<8x256xf32>
    %c239_i32 = arith.constant 239 : i32
    %55 = tpu.dynamic_rotate %31 by %c239_i32 dim 1 : vector<8x256xf32>, i32 -> vector<8x256xf32>
    %56 = vector.broadcast %17 : vector<1x256xf32> to vector<8x256xf32>
    %57 = arith.mulf %55, %56 : vector<8x256xf32>
    %58 = tpu.concatenate %34, %37, %40, %43, %45, %48, %51, %54, %57 in 0 : vector<8x256xf32>, vector<8x256xf32>, vector<8x256xf32>, vector<8x256xf32>, vector<8x256xf32>, vector<8x256xf32>, vector<8x256xf32>, vector<8x256xf32>, vector<8x256xf32> -> vector<72x256xf32>
    %cst_36 = arith.constant dense<0.000000e+00> : vector<8x256xf32>
    %59 = tpu.matmul %21, %58, %cst_36 {dimension_numbers = #tpu.dot_dimension_numbers<[1], [0], [0], [1], [0, 0, 1, 1], [], []>} : vector<8x72xf32>, vector<72x256xf32>, vector<8x256xf32> -> vector<8x256xf32>
    %60 = vector.broadcast %23 : vector<8x1xf32> to vector<8x256xf32>
    %61 = arith.addf %59, %60 : vector<8x256xf32>
    %cst_37 = arith.constant 0.000000e+00 : f32
    %62 = vector.broadcast %cst_37 : f32 to vector<8x256xf32>
    %63 = arith.maximumf %61, %62 : vector<8x256xf32>
    %64 = arith.addf %31, %63 : vector<8x256xf32>
    %c17_i32_38 = arith.constant 17 : i32
    %65 = tpu.dynamic_rotate %64 by %c17_i32_38 dim 1 : vector<8x256xf32>, i32 -> vector<8x256xf32>
    %66 = vector.broadcast %1 : vector<1x256xf32> to vector<8x256xf32>
    %67 = arith.mulf %65, %66 : vector<8x256xf32>
    %c16_i32_39 = arith.constant 16 : i32
    %68 = tpu.dynamic_rotate %64 by %c16_i32_39 dim 1 : vector<8x256xf32>, i32 -> vector<8x256xf32>
    %69 = vector.broadcast %3 : vector<1x256xf32> to vector<8x256xf32>
    %70 = arith.mulf %68, %69 : vector<8x256xf32>
    %c15_i32_40 = arith.constant 15 : i32
    %71 = tpu.dynamic_rotate %64 by %c15_i32_40 dim 1 : vector<8x256xf32>, i32 -> vector<8x256xf32>
    %72 = vector.broadcast %5 : vector<1x256xf32> to vector<8x256xf32>
    %73 = arith.mulf %71, %72 : vector<8x256xf32>
    %c1_i32_41 = arith.constant 1 : i32
    %74 = tpu.dynamic_rotate %64 by %c1_i32_41 dim 1 : vector<8x256xf32>, i32 -> vector<8x256xf32>
    %75 = vector.broadcast %7 : vector<1x256xf32> to vector<8x256xf32>
    %76 = arith.mulf %74, %75 : vector<8x256xf32>
    %77 = vector.broadcast %9 : vector<1x256xf32> to vector<8x256xf32>
    %78 = arith.mulf %64, %77 : vector<8x256xf32>
    %c255_i32_42 = arith.constant 255 : i32
    %79 = tpu.dynamic_rotate %64 by %c255_i32_42 dim 1 : vector<8x256xf32>, i32 -> vector<8x256xf32>
    %80 = vector.broadcast %11 : vector<1x256xf32> to vector<8x256xf32>
    %81 = arith.mulf %79, %80 : vector<8x256xf32>
    %c241_i32_43 = arith.constant 241 : i32
    %82 = tpu.dynamic_rotate %64 by %c241_i32_43 dim 1 : vector<8x256xf32>, i32 -> vector<8x256xf32>
    %83 = vector.broadcast %13 : vector<1x256xf32> to vector<8x256xf32>
    %84 = arith.mulf %82, %83 : vector<8x256xf32>
    %c240_i32_44 = arith.constant 240 : i32
    %85 = tpu.dynamic_rotate %64 by %c240_i32_44 dim 1 : vector<8x256xf32>, i32 -> vector<8x256xf32>
    %86 = vector.broadcast %15 : vector<1x256xf32> to vector<8x256xf32>
    %87 = arith.mulf %85, %86 : vector<8x256xf32>
    %c239_i32_45 = arith.constant 239 : i32
    %88 = tpu.dynamic_rotate %64 by %c239_i32_45 dim 1 : vector<8x256xf32>, i32 -> vector<8x256xf32>
    %89 = vector.broadcast %17 : vector<1x256xf32> to vector<8x256xf32>
    %90 = arith.mulf %88, %89 : vector<8x256xf32>
    %91 = tpu.concatenate %67, %70, %73, %76, %78, %81, %84, %87, %90 in 0 : vector<8x256xf32>, vector<8x256xf32>, vector<8x256xf32>, vector<8x256xf32>, vector<8x256xf32>, vector<8x256xf32>, vector<8x256xf32>, vector<8x256xf32>, vector<8x256xf32> -> vector<72x256xf32>
    %cst_46 = arith.constant dense<0.000000e+00> : vector<8x256xf32>
    %92 = tpu.matmul %21, %91, %cst_46 {dimension_numbers = #tpu.dot_dimension_numbers<[1], [0], [0], [1], [0, 0, 1, 1], [], []>} : vector<8x72xf32>, vector<72x256xf32>, vector<8x256xf32> -> vector<8x256xf32>
    %93 = vector.broadcast %23 : vector<8x1xf32> to vector<8x256xf32>
    %94 = arith.addf %92, %93 : vector<8x256xf32>
    %cst_47 = arith.constant 0.000000e+00 : f32
    %95 = vector.broadcast %cst_47 : f32 to vector<8x256xf32>
    %96 = arith.maximumf %94, %95 : vector<8x256xf32>
    %97 = arith.addf %31, %96 : vector<8x256xf32>
    %c17_i32_48 = arith.constant 17 : i32
    %98 = tpu.dynamic_rotate %97 by %c17_i32_48 dim 1 : vector<8x256xf32>, i32 -> vector<8x256xf32>
    %99 = vector.broadcast %1 : vector<1x256xf32> to vector<8x256xf32>
    %100 = arith.mulf %98, %99 : vector<8x256xf32>
    %c16_i32_49 = arith.constant 16 : i32
    %101 = tpu.dynamic_rotate %97 by %c16_i32_49 dim 1 : vector<8x256xf32>, i32 -> vector<8x256xf32>
    %102 = vector.broadcast %3 : vector<1x256xf32> to vector<8x256xf32>
    %103 = arith.mulf %101, %102 : vector<8x256xf32>
    %c15_i32_50 = arith.constant 15 : i32
    %104 = tpu.dynamic_rotate %97 by %c15_i32_50 dim 1 : vector<8x256xf32>, i32 -> vector<8x256xf32>
    %105 = vector.broadcast %5 : vector<1x256xf32> to vector<8x256xf32>
    %106 = arith.mulf %104, %105 : vector<8x256xf32>
    %c1_i32_51 = arith.constant 1 : i32
    %107 = tpu.dynamic_rotate %97 by %c1_i32_51 dim 1 : vector<8x256xf32>, i32 -> vector<8x256xf32>
    %108 = vector.broadcast %7 : vector<1x256xf32> to vector<8x256xf32>
    %109 = arith.mulf %107, %108 : vector<8x256xf32>
    %110 = vector.broadcast %9 : vector<1x256xf32> to vector<8x256xf32>
    %111 = arith.mulf %97, %110 : vector<8x256xf32>
    %c255_i32_52 = arith.constant 255 : i32
    %112 = tpu.dynamic_rotate %97 by %c255_i32_52 dim 1 : vector<8x256xf32>, i32 -> vector<8x256xf32>
    %113 = vector.broadcast %11 : vector<1x256xf32> to vector<8x256xf32>
    %114 = arith.mulf %112, %113 : vector<8x256xf32>
    %c241_i32_53 = arith.constant 241 : i32
    %115 = tpu.dynamic_rotate %97 by %c241_i32_53 dim 1 : vector<8x256xf32>, i32 -> vector<8x256xf32>
    %116 = vector.broadcast %13 : vector<1x256xf32> to vector<8x256xf32>
    %117 = arith.mulf %115, %116 : vector<8x256xf32>
    %c240_i32_54 = arith.constant 240 : i32
    %118 = tpu.dynamic_rotate %97 by %c240_i32_54 dim 1 : vector<8x256xf32>, i32 -> vector<8x256xf32>
    %119 = vector.broadcast %15 : vector<1x256xf32> to vector<8x256xf32>
    %120 = arith.mulf %118, %119 : vector<8x256xf32>
    %c239_i32_55 = arith.constant 239 : i32
    %121 = tpu.dynamic_rotate %97 by %c239_i32_55 dim 1 : vector<8x256xf32>, i32 -> vector<8x256xf32>
    %122 = vector.broadcast %17 : vector<1x256xf32> to vector<8x256xf32>
    %123 = arith.mulf %121, %122 : vector<8x256xf32>
    %124 = tpu.concatenate %100, %103, %106, %109, %111, %114, %117, %120, %123 in 0 : vector<8x256xf32>, vector<8x256xf32>, vector<8x256xf32>, vector<8x256xf32>, vector<8x256xf32>, vector<8x256xf32>, vector<8x256xf32>, vector<8x256xf32>, vector<8x256xf32> -> vector<72x256xf32>
    %cst_56 = arith.constant dense<0.000000e+00> : vector<8x256xf32>
    %125 = tpu.matmul %21, %124, %cst_56 {dimension_numbers = #tpu.dot_dimension_numbers<[1], [0], [0], [1], [0, 0, 1, 1], [], []>} : vector<8x72xf32>, vector<72x256xf32>, vector<8x256xf32> -> vector<8x256xf32>
    %126 = vector.broadcast %23 : vector<8x1xf32> to vector<8x256xf32>
    %127 = arith.addf %125, %126 : vector<8x256xf32>
    %cst_57 = arith.constant 0.000000e+00 : f32
    %128 = vector.broadcast %cst_57 : f32 to vector<8x256xf32>
    %129 = arith.maximumf %127, %128 : vector<8x256xf32>
    %c17_i32_58 = arith.constant 17 : i32
    %130 = tpu.dynamic_rotate %129 by %c17_i32_58 dim 1 : vector<8x256xf32>, i32 -> vector<8x256xf32>
    %131 = vector.broadcast %1 : vector<1x256xf32> to vector<8x256xf32>
    %132 = arith.mulf %130, %131 : vector<8x256xf32>
    %c16_i32_59 = arith.constant 16 : i32
    %133 = tpu.dynamic_rotate %129 by %c16_i32_59 dim 1 : vector<8x256xf32>, i32 -> vector<8x256xf32>
    %134 = vector.broadcast %3 : vector<1x256xf32> to vector<8x256xf32>
    %135 = arith.mulf %133, %134 : vector<8x256xf32>
    %c15_i32_60 = arith.constant 15 : i32
    %136 = tpu.dynamic_rotate %129 by %c15_i32_60 dim 1 : vector<8x256xf32>, i32 -> vector<8x256xf32>
    %137 = vector.broadcast %5 : vector<1x256xf32> to vector<8x256xf32>
    %138 = arith.mulf %136, %137 : vector<8x256xf32>
    %c1_i32_61 = arith.constant 1 : i32
    %139 = tpu.dynamic_rotate %129 by %c1_i32_61 dim 1 : vector<8x256xf32>, i32 -> vector<8x256xf32>
    %140 = vector.broadcast %7 : vector<1x256xf32> to vector<8x256xf32>
    %141 = arith.mulf %139, %140 : vector<8x256xf32>
    %142 = vector.broadcast %9 : vector<1x256xf32> to vector<8x256xf32>
    %143 = arith.mulf %129, %142 : vector<8x256xf32>
    %c255_i32_62 = arith.constant 255 : i32
    %144 = tpu.dynamic_rotate %129 by %c255_i32_62 dim 1 : vector<8x256xf32>, i32 -> vector<8x256xf32>
    %145 = vector.broadcast %11 : vector<1x256xf32> to vector<8x256xf32>
    %146 = arith.mulf %144, %145 : vector<8x256xf32>
    %c241_i32_63 = arith.constant 241 : i32
    %147 = tpu.dynamic_rotate %129 by %c241_i32_63 dim 1 : vector<8x256xf32>, i32 -> vector<8x256xf32>
    %148 = vector.broadcast %13 : vector<1x256xf32> to vector<8x256xf32>
    %149 = arith.mulf %147, %148 : vector<8x256xf32>
    %c240_i32_64 = arith.constant 240 : i32
    %150 = tpu.dynamic_rotate %129 by %c240_i32_64 dim 1 : vector<8x256xf32>, i32 -> vector<8x256xf32>
    %151 = vector.broadcast %15 : vector<1x256xf32> to vector<8x256xf32>
    %152 = arith.mulf %150, %151 : vector<8x256xf32>
    %c239_i32_65 = arith.constant 239 : i32
    %153 = tpu.dynamic_rotate %129 by %c239_i32_65 dim 1 : vector<8x256xf32>, i32 -> vector<8x256xf32>
    %154 = vector.broadcast %17 : vector<1x256xf32> to vector<8x256xf32>
    %155 = arith.mulf %153, %154 : vector<8x256xf32>
    %156 = tpu.concatenate %132, %135, %138, %141, %143, %146, %149, %152, %155 in 0 : vector<8x256xf32>, vector<8x256xf32>, vector<8x256xf32>, vector<8x256xf32>, vector<8x256xf32>, vector<8x256xf32>, vector<8x256xf32>, vector<8x256xf32>, vector<8x256xf32> -> vector<72x256xf32>
    %cst_66 = arith.constant dense<0.000000e+00> : vector<8x256xf32>
    %157 = tpu.matmul %25, %156, %cst_66 {dimension_numbers = #tpu.dot_dimension_numbers<[1], [0], [0], [1], [0, 0, 1, 1], [], []>} : vector<8x72xf32>, vector<72x256xf32>, vector<8x256xf32> -> vector<8x256xf32>
    %158 = vector.broadcast %27 : vector<8x1xf32> to vector<8x256xf32>
    %159 = arith.addf %157, %158 : vector<8x256xf32>
    %cst_67 = arith.constant 0.000000e+00 : f32
    %160 = vector.broadcast %cst_67 : f32 to vector<8x256xf32>
    %161 = arith.maximumf %159, %160 : vector<8x256xf32>
    %162 = arith.addf %129, %161 : vector<8x256xf32>
    %c17_i32_68 = arith.constant 17 : i32
    %163 = tpu.dynamic_rotate %162 by %c17_i32_68 dim 1 : vector<8x256xf32>, i32 -> vector<8x256xf32>
    %164 = vector.broadcast %1 : vector<1x256xf32> to vector<8x256xf32>
    %165 = arith.mulf %163, %164 : vector<8x256xf32>
    %c16_i32_69 = arith.constant 16 : i32
    %166 = tpu.dynamic_rotate %162 by %c16_i32_69 dim 1 : vector<8x256xf32>, i32 -> vector<8x256xf32>
    %167 = vector.broadcast %3 : vector<1x256xf32> to vector<8x256xf32>
    %168 = arith.mulf %166, %167 : vector<8x256xf32>
    %c15_i32_70 = arith.constant 15 : i32
    %169 = tpu.dynamic_rotate %162 by %c15_i32_70 dim 1 : vector<8x256xf32>, i32 -> vector<8x256xf32>
    %170 = vector.broadcast %5 : vector<1x256xf32> to vector<8x256xf32>
    %171 = arith.mulf %169, %170 : vector<8x256xf32>
    %c1_i32_71 = arith.constant 1 : i32
    %172 = tpu.dynamic_rotate %162 by %c1_i32_71 dim 1 : vector<8x256xf32>, i32 -> vector<8x256xf32>
    %173 = vector.broadcast %7 : vector<1x256xf32> to vector<8x256xf32>
    %174 = arith.mulf %172, %173 : vector<8x256xf32>
    %175 = vector.broadcast %9 : vector<1x256xf32> to vector<8x256xf32>
    %176 = arith.mulf %162, %175 : vector<8x256xf32>
    %c255_i32_72 = arith.constant 255 : i32
    %177 = tpu.dynamic_rotate %162 by %c255_i32_72 dim 1 : vector<8x256xf32>, i32 -> vector<8x256xf32>
    %178 = vector.broadcast %11 : vector<1x256xf32> to vector<8x256xf32>
    %179 = arith.mulf %177, %178 : vector<8x256xf32>
    %c241_i32_73 = arith.constant 241 : i32
    %180 = tpu.dynamic_rotate %162 by %c241_i32_73 dim 1 : vector<8x256xf32>, i32 -> vector<8x256xf32>
    %181 = vector.broadcast %13 : vector<1x256xf32> to vector<8x256xf32>
    %182 = arith.mulf %180, %181 : vector<8x256xf32>
    %c240_i32_74 = arith.constant 240 : i32
    %183 = tpu.dynamic_rotate %162 by %c240_i32_74 dim 1 : vector<8x256xf32>, i32 -> vector<8x256xf32>
    %184 = vector.broadcast %15 : vector<1x256xf32> to vector<8x256xf32>
    %185 = arith.mulf %183, %184 : vector<8x256xf32>
    %c239_i32_75 = arith.constant 239 : i32
    %186 = tpu.dynamic_rotate %162 by %c239_i32_75 dim 1 : vector<8x256xf32>, i32 -> vector<8x256xf32>
    %187 = vector.broadcast %17 : vector<1x256xf32> to vector<8x256xf32>
    %188 = arith.mulf %186, %187 : vector<8x256xf32>
    %189 = tpu.concatenate %165, %168, %171, %174, %176, %179, %182, %185, %188 in 0 : vector<8x256xf32>, vector<8x256xf32>, vector<8x256xf32>, vector<8x256xf32>, vector<8x256xf32>, vector<8x256xf32>, vector<8x256xf32>, vector<8x256xf32>, vector<8x256xf32> -> vector<72x256xf32>
    %cst_76 = arith.constant dense<0.000000e+00> : vector<8x256xf32>
    %190 = tpu.matmul %25, %189, %cst_76 {dimension_numbers = #tpu.dot_dimension_numbers<[1], [0], [0], [1], [0, 0, 1, 1], [], []>} : vector<8x72xf32>, vector<72x256xf32>, vector<8x256xf32> -> vector<8x256xf32>
    %191 = vector.broadcast %27 : vector<8x1xf32> to vector<8x256xf32>
    %192 = arith.addf %190, %191 : vector<8x256xf32>
    %cst_77 = arith.constant 0.000000e+00 : f32
    %193 = vector.broadcast %cst_77 : f32 to vector<8x256xf32>
    %194 = arith.maximumf %192, %193 : vector<8x256xf32>
    %195 = arith.addf %129, %194 : vector<8x256xf32>
    %c17_i32_78 = arith.constant 17 : i32
    %196 = tpu.dynamic_rotate %195 by %c17_i32_78 dim 1 : vector<8x256xf32>, i32 -> vector<8x256xf32>
    %197 = vector.broadcast %1 : vector<1x256xf32> to vector<8x256xf32>
    %198 = arith.mulf %196, %197 : vector<8x256xf32>
    %c16_i32_79 = arith.constant 16 : i32
    %199 = tpu.dynamic_rotate %195 by %c16_i32_79 dim 1 : vector<8x256xf32>, i32 -> vector<8x256xf32>
    %200 = vector.broadcast %3 : vector<1x256xf32> to vector<8x256xf32>
    %201 = arith.mulf %199, %200 : vector<8x256xf32>
    %c15_i32_80 = arith.constant 15 : i32
    %202 = tpu.dynamic_rotate %195 by %c15_i32_80 dim 1 : vector<8x256xf32>, i32 -> vector<8x256xf32>
    %203 = vector.broadcast %5 : vector<1x256xf32> to vector<8x256xf32>
    %204 = arith.mulf %202, %203 : vector<8x256xf32>
    %c1_i32_81 = arith.constant 1 : i32
    %205 = tpu.dynamic_rotate %195 by %c1_i32_81 dim 1 : vector<8x256xf32>, i32 -> vector<8x256xf32>
    %206 = vector.broadcast %7 : vector<1x256xf32> to vector<8x256xf32>
    %207 = arith.mulf %205, %206 : vector<8x256xf32>
    %208 = vector.broadcast %9 : vector<1x256xf32> to vector<8x256xf32>
    %209 = arith.mulf %195, %208 : vector<8x256xf32>
    %c255_i32_82 = arith.constant 255 : i32
    %210 = tpu.dynamic_rotate %195 by %c255_i32_82 dim 1 : vector<8x256xf32>, i32 -> vector<8x256xf32>
    %211 = vector.broadcast %11 : vector<1x256xf32> to vector<8x256xf32>
    %212 = arith.mulf %210, %211 : vector<8x256xf32>
    %c241_i32_83 = arith.constant 241 : i32
    %213 = tpu.dynamic_rotate %195 by %c241_i32_83 dim 1 : vector<8x256xf32>, i32 -> vector<8x256xf32>
    %214 = vector.broadcast %13 : vector<1x256xf32> to vector<8x256xf32>
    %215 = arith.mulf %213, %214 : vector<8x256xf32>
    %c240_i32_84 = arith.constant 240 : i32
    %216 = tpu.dynamic_rotate %195 by %c240_i32_84 dim 1 : vector<8x256xf32>, i32 -> vector<8x256xf32>
    %217 = vector.broadcast %15 : vector<1x256xf32> to vector<8x256xf32>
    %218 = arith.mulf %216, %217 : vector<8x256xf32>
    %c239_i32_85 = arith.constant 239 : i32
    %219 = tpu.dynamic_rotate %195 by %c239_i32_85 dim 1 : vector<8x256xf32>, i32 -> vector<8x256xf32>
    %220 = vector.broadcast %17 : vector<1x256xf32> to vector<8x256xf32>
    %221 = arith.mulf %219, %220 : vector<8x256xf32>
    %222 = tpu.concatenate %198, %201, %204, %207, %209, %212, %215, %218, %221 in 0 : vector<8x256xf32>, vector<8x256xf32>, vector<8x256xf32>, vector<8x256xf32>, vector<8x256xf32>, vector<8x256xf32>, vector<8x256xf32>, vector<8x256xf32>, vector<8x256xf32> -> vector<72x256xf32>
    %cst_86 = arith.constant dense<0.000000e+00> : vector<8x256xf32>
    %223 = tpu.matmul %25, %222, %cst_86 {dimension_numbers = #tpu.dot_dimension_numbers<[1], [0], [0], [1], [0, 0, 1, 1], [], []>} : vector<8x72xf32>, vector<72x256xf32>, vector<8x256xf32> -> vector<8x256xf32>
    %224 = vector.broadcast %27 : vector<8x1xf32> to vector<8x256xf32>
    %225 = arith.addf %223, %224 : vector<8x256xf32>
    %cst_87 = arith.constant 0.000000e+00 : f32
    %226 = vector.broadcast %cst_87 : f32 to vector<8x256xf32>
    %227 = arith.maximumf %225, %226 : vector<8x256xf32>
    %228 = arith.addf %31, %227 : vector<8x256xf32>
    %c0_88 = arith.constant 0 : index
    %c0_89 = arith.constant 0 : index
    %229 = vector.load %arg7[%c0_88, %c0_89] : memref<8x256xf32, #tpu.memory_space<vmem>>, vector<8x256xf32>
    tpu.vector_store %arg7[%c0_88, %c0_89], %228 {strides = array<i32>} : memref<8x256xf32, #tpu.memory_space<vmem>>, vector<8x256xf32>,
    return
  }
  func.func @transform_0(%arg0: i32) -> (i32, i32) {
    %c0_i32 = arith.constant 0 : i32
    %c0_i32_0 = arith.constant 0 : i32
    return %c0_i32, %arg0 : i32, i32
  }
  func.func @transform_1(%arg0: i32) -> (i32, i32, i32) {
    %c0_i32 = arith.constant 0 : i32
    %c0_i32_0 = arith.constant 0 : i32
    %c0_i32_1 = arith.constant 0 : i32
    %c0_i32_2 = arith.constant 0 : i32
    return %c0_i32, %c0_i32_0, %c0_i32_1 : i32, i32, i32
  }
  func.func @transform_2(%arg0: i32) -> (i32, i32) {
    %c0_i32 = arith.constant 0 : i32
    %c0_i32_0 = arith.constant 0 : i32
    %c0_i32_1 = arith.constant 0 : i32
    return %c0_i32, %c0_i32_0 : i32, i32
  }
  func.func @transform_3(%arg0: i32) -> (i32, i32) {
    %c0_i32 = arith.constant 0 : i32
    %c0_i32_0 = arith.constant 0 : i32
    %c0_i32_1 = arith.constant 0 : i32
    return %c0_i32, %c0_i32_0 : i32, i32
  }
  func.func @transform_4(%arg0: i32) -> (i32, i32, i32) {
    %c0_i32 = arith.constant 0 : i32
    %c0_i32_0 = arith.constant 0 : i32
    %c0_i32_1 = arith.constant 0 : i32
    %c0_i32_2 = arith.constant 0 : i32
    return %c0_i32, %c0_i32_0, %c0_i32_1 : i32, i32, i32
  }
  func.func @transform_5(%arg0: i32) -> (i32, i32, i32) {
    %c0_i32 = arith.constant 0 : i32
    %c0_i32_0 = arith.constant 0 : i32
    %c0_i32_1 = arith.constant 0 : i32
    %c0_i32_2 = arith.constant 0 : i32
    return %c0_i32, %c0_i32_0, %c0_i32_1 : i32, i32, i32
  }
  func.func @transform_6(%arg0: i32) -> (i32, i32) {
    %c0_i32 = arith.constant 0 : i32
    %c0_i32_0 = arith.constant 0 : i32
    return %c0_i32, %arg0 : i32, i32
  }
}

</mosaic_0001>

<llo_original>
// kernel: tpu_custom_call.1
$region0: #{tpu_custom_call.1}
  #allocation0 [shape = 'u32[]', space=smem, size = 0x4, offset = 0x4, fixed_abs, tag = 'smem constant byte address 0x4 - core index']
  #allocation1 [shape = 'u32[144,128]{1,0:T(1,128)}', space=vmem, size = 0x12000, scoped, tag = 'internal scratch']
  %s0 = inlined_call_operand.vmem [shape: f32[4,512], index: 0, kind: input, shape index: {}]
  %s1 = inlined_call_operand.vmem [shape: f32[9,1,256], index: 1, kind: input, shape index: {}]
  %s2 = inlined_call_operand.vmem [shape: f32[8,4], index: 2, kind: input, shape index: {}]
  %s3 = inlined_call_operand.vmem [shape: f32[8,1], index: 3, kind: input, shape index: {}]
  %s4 = inlined_call_operand.hbm [shape: f32[2,8,72], index: 4, kind: input, shape index: {}]
  %s5 = inlined_call_operand.vmem [shape: f32[2,8,1], index: 5, kind: input, shape index: {}]
  %s6 = inlined_call_operand.hbm [shape: f32[8,512], index: 6, kind: output, shape index: {}]
  %s7 = sld [smem:[#allocation0]]
  $region61: #{tpu_custom_call.1} parent=0
    _
  %s9 = ssub.s32 1, %s7
  %s10 = scalar_select 0, %s9, %s7
  $region1: #{tpu_custom_call.1} parent=0
    #allocation2 [shape = 'u8[8192]{0}', space=vmem, size = 0x2000, scoped, tag = 'input window, operand 4, single buffered']
    #allocation3 [shape = 's32[2]{0}', space=sflag, size = 0x8, scoped, tag = 'scoped memory for tpu_custom_call.1']
    #allocation4 [shape = 's32[2]{0}', space=sflag, size = 0x8, scoped, tag = 'scoped memory for tpu_custom_call.1']
    #allocation5 [shape = 'u8[16384]{0}', space=vmem, size = 0x4000, scoped, tag = 'output window, operand 0']
    %11 = vsyncpa [#allocation3], 0
    %12 = vsyncpa [#allocation4], 0
    %s13 = scalar_lea.sflag [#allocation4], 1
    %14 = vsyncpa %s13, 0
    loop: start=0, step=1, limit=4
    $region2: #{tpu_custom_call.1} parent=1 // loop_pre_header
      _
    $region3: #{tpu_custom_call.1} parent=1 // loop_header
      %s16 = sphi 0, %s20
      %p17 = scmp.ge.s32.totalorder %s16, 4
      %s26 = sphi 0, %s28
      %s29 = sphi 0, %s26
      %s30 = sphi 0, %s29
      %s46 = sphi 0, %s30
      %s50 = sphi 0, %s50
      %s52 = sphi 0, %s50
      %s53 = sphi 0, %s52
      %s67 = sphi 0, %s53
      %s71 = sphi 0, %s71
      %s73 = sphi 0, %s71
      %s74 = sphi 0, %s73
      %s88 = sphi 0, %s74
      %s92 = sphi 0, %s92
      %s94 = sphi 0, %s92
      %s95 = sphi 0, %s94
      %s109 = sphi 0, %s95
      %s113 = sphi 0, %s113
      %s115 = sphi 0, %s113
      %s116 = sphi 0, %s115
      %s130 = sphi 0, %s116
      %s134 = sphi 0, %s134
      %s136 = sphi 0, %s134
      %s137 = sphi 0, %s136
      %s151 = sphi 0, %s137
      %s157 = sphi 0, %s159
      %s160 = sphi 0, %s157
      %s161 = sphi 0, %s160
      %s177 = sphi 0, %s161
    $region4: #{tpu_custom_call.1} parent=1 // loop_header_branch
      %19 = sbr.rel (%p17) target = $region8
    $region5: #{tpu_custom_call.1} parent=1 // loop_body
      %s21 = ssub.s32 %s16, 1
      %s22 = ssub.s32 %s16, 2
      %s23 = sadd.s32 %s16, 1
      %s24 = ssub.s32 %s16, %s23
      %p25 = scmp.eq.s32.totalorder %s24, 0
      %s27 = sadd.s32 %s26, 1
      %s28 = scalar_select %p25, %s26, %s27
      %p31 = pneg %p25
      %p32 = scmp.eq.s32.totalorder %s16, 1
      %p33 = por %p31, %p32
      %p34 = scmp.ne.s32.totalorder %s26, %s29
      %p35 = scmp.eq.s32.totalorder %s16, 0
      %p36 = por %p34, %p35
      %p37 = scmp.ne.s32.totalorder %s26, %s29
      %p38 = scmp.eq.s32.totalorder %s21, 1
      %p39 = por %p37, %p38
      %p40 = scmp.ne.s32.totalorder %s29, %s30
      %p41 = scmp.eq.s32.totalorder %s21, 0
      %p42 = por %p40, %p41
      %p43 = scmp.ne.s32.totalorder %s29, %s30
      %p44 = scmp.eq.s32.totalorder %s22, 1
      %p45 = por %p43, %p44
      %p47 = scmp.ne.s32.totalorder %s30, %s46
      %p48 = scmp.eq.s32.totalorder %s22, 0
      %p49 = por %p47, %p48
      %s51 = sadd.s32 %s50, 1
      %p54 = scmp.eq.s32.totalorder %s16, 1
      %p55 = scmp.ne.s32.totalorder %s50, %s52
      %p56 = scmp.eq.s32.totalorder %s16, 0
      %p57 = por %p55, %p56
      %p58 = scmp.ne.s32.totalorder %s50, %s52
      %p59 = scmp.eq.s32.totalorder %s21, 1
      %p60 = por %p58, %p59
      %p61 = scmp.ne.s32.totalorder %s52, %s53
      %p62 = scmp.eq.s32.totalorder %s21, 0
      %p63 = por %p61, %p62
      %p64 = scmp.ne.s32.totalorder %s52, %s53
      %p65 = scmp.eq.s32.totalorder %s22, 1
      %p66 = por %p64, %p65
      %p68 = scmp.ne.s32.totalorder %s53, %s67
      %p69 = scmp.eq.s32.totalorder %s22, 0
      %p70 = por %p68, %p69
      %s72 = sadd.s32 %s71, 1
      %p75 = scmp.eq.s32.totalorder %s16, 1
      %p76 = scmp.ne.s32.totalorder %s71, %s73
      %p77 = scmp.eq.s32.totalorder %s16, 0
      %p78 = por %p76, %p77
      %p79 = scmp.ne.s32.totalorder %s71, %s73
      %p80 = scmp.eq.s32.totalorder %s21, 1
      %p81 = por %p79, %p80
      %p82 = scmp.ne.s32.totalorder %s73, %s74
      %p83 = scmp.eq.s32.totalorder %s21, 0
      %p84 = por %p82, %p83
      %p85 = scmp.ne.s32.totalorder %s73, %s74
      %p86 = scmp.eq.s32.totalorder %s22, 1
      %p87 = por %p85, %p86
      %p89 = scmp.ne.s32.totalorder %s74, %s88
      %p90 = scmp.eq.s32.totalorder %s22, 0
      %p91 = por %p89, %p90
      %s93 = sadd.s32 %s92, 1
      %p96 = scmp.eq.s32.totalorder %s16, 1
      %p97 = scmp.ne.s32.totalorder %s92, %s94
      %p98 = scmp.eq.s32.totalorder %s16, 0
      %p99 = por %p97, %p98
      %p100 = scmp.ne.s32.totalorder %s92, %s94
      %p101 = scmp.eq.s32.totalorder %s21, 1
      %p102 = por %p100, %p101
      %p103 = scmp.ne.s32.totalorder %s94, %s95
      %p104 = scmp.eq.s32.totalorder %s21, 0
      %p105 = por %p103, %p104
      %p106 = scmp.ne.s32.totalorder %s94, %s95
      %p107 = scmp.eq.s32.totalorder %s22, 1
      %p108 = por %p106, %p107
      %p110 = scmp.ne.s32.totalorder %s95, %s109
      %p111 = scmp.eq.s32.totalorder %s22, 0
      %p112 = por %p110, %p111
      %s114 = sadd.s32 %s113, 1
      %p117 = scmp.eq.s32.totalorder %s16, 1
      %p118 = scmp.ne.s32.totalorder %s113, %s115
      %p119 = scmp.eq.s32.totalorder %s16, 0
      %p120 = por %p118, %p119
      %p121 = scmp.ne.s32.totalorder %s113, %s115
      %p122 = scmp.eq.s32.totalorder %s21, 1
      %p123 = por %p121, %p122
      %p124 = scmp.ne.s32.totalorder %s115, %s116
      %p125 = scmp.eq.s32.totalorder %s21, 0
      %p126 = por %p124, %p125
      %p127 = scmp.ne.s32.totalorder %s115, %s116
      %p128 = scmp.eq.s32.totalorder %s22, 1
      %p129 = por %p127, %p128
      %p131 = scmp.ne.s32.totalorder %s116, %s130
      %p132 = scmp.eq.s32.totalorder %s22, 0
      %p133 = por %p131, %p132
      %s135 = sadd.s32 %s134, 1
      %p138 = scmp.eq.s32.totalorder %s16, 1
      %p139 = scmp.ne.s32.totalorder %s134, %s136
      %p140 = scmp.eq.s32.totalorder %s16, 0
      %p141 = por %p139, %p140
      %p142 = scmp.ne.s32.totalorder %s134, %s136
      %p143 = scmp.eq.s32.totalorder %s21, 1
      %p144 = por %p142, %p143
      %p145 = scmp.ne.s32.totalorder %s136, %s137
      %p146 = scmp.eq.s32.totalorder %s21, 0
      %p147 = por %p145, %p146
      %p148 = scmp.ne.s32.totalorder %s136, %s137
      %p149 = scmp.eq.s32.totalorder %s22, 1
      %p150 = por %p148, %p149
      %p152 = scmp.ne.s32.totalorder %s137, %s151
      %p153 = scmp.eq.s32.totalorder %s22, 0
      %p154 = por %p152, %p153
      %s155 = ssub.s32 %s16, %s23
      %p156 = scmp.eq.s32.totalorder %s155, 0
      %s158 = sadd.s32 %s157, 1
      %s159 = scalar_select %p156, %s157, %s158
      %p162 = pneg %p156
      %p163 = scmp.eq.s32.totalorder %s16, 1
      %p164 = por %p162, %p163
      %p165 = scmp.ne.s32.totalorder %s157, %s160
      %p166 = scmp.eq.s32.totalorder %s16, 0
      %p167 = por %p165, %p166
      %p168 = scmp.ne.s32.totalorder %s157, %s160
      %p169 = scmp.eq.s32.totalorder %s21, 1
      %p170 = por %p168, %p169
      %p171 = scmp.ne.s32.totalorder %s160, %s161
      %p172 = scmp.eq.s32.totalorder %s21, 0
      %p173 = por %p171, %p172
      %p174 = scmp.ne.s32.totalorder %s160, %s161
      %p175 = scmp.eq.s32.totalorder %s22, 1
      %p176 = por %p174, %p175
      %p178 = scmp.ne.s32.totalorder %s161, %s177
      %p179 = scmp.eq.s32.totalorder %s22, 0
      %p180 = por %p178, %p179
      %p181 = scmp.le.s32.totalorder 1, %s16
      %p182 = scmp.lt.s32.totalorder %s16, 3
      %p183 = pnand %p181, %p182
      %p184 = pneg %p183
      // Predicated region
      $region9: #{tpu_custom_call.1} parent=5 // pred_check
        _
      $region10: #{tpu_custom_call.1} parent=5 // pred_check_branch
        %186 = sbr.rel (%p183) target = $region12
      $region11: #{tpu_custom_call.1} parent=5 // pred_region
        %s187 = ssub.s32 %s16, 1
        // Predicated region
        $region13: #{tpu_custom_call.1} parent=11 // pred_check
          %p188 = pneg %p63
        $region14: #{tpu_custom_call.1} parent=11 // pred_check_branch
          %190 = sbr.rel (%p188) target = $region16
        $region15: #{tpu_custom_call.1} parent=11 // pred_region
          _
        $region16: #{tpu_custom_call.1} parent=11 // pred_fallthru
          _
        // Predicated region
        $region17: #{tpu_custom_call.1} parent=11 // pred_check
          %p191 = pneg %p84
        $region18: #{tpu_custom_call.1} parent=11 // pred_check_branch
          %193 = sbr.rel (%p191) target = $region20
        $region19: #{tpu_custom_call.1} parent=11 // pred_region
          _
        $region20: #{tpu_custom_call.1} parent=11 // pred_fallthru
          _
        // Predicated region
        $region21: #{tpu_custom_call.1} parent=11 // pred_check
          %p194 = pneg %p105
        $region22: #{tpu_custom_call.1} parent=11 // pred_check_branch
          %196 = sbr.rel (%p194) target = $region24
        $region23: #{tpu_custom_call.1} parent=11 // pred_region
          _
        $region24: #{tpu_custom_call.1} parent=11 // pred_fallthru
          _
        // Predicated region
        $region25: #{tpu_custom_call.1} parent=11 // pred_check
          %p197 = pneg %p126
        $region26: #{tpu_custom_call.1} parent=11 // pred_check_branch
          %199 = sbr.rel (%p197) target = $region28
        $region27: #{tpu_custom_call.1} parent=11 // pred_region
          %s201 = ssub.s32 256, 256
          %202 = vsyncadd [#allocation3], %s201
          %s203 = sshll.u32 [#allocation2], 4
          %s204 = int_to_ptr.vmem [resolvable:$true] %s203
          %209 = dma.hbm_to_vmem [thread:$0]  %s4, 256, %s204, [#allocation3], 128, 128, 8
        $region28: #{tpu_custom_call.1} parent=11 // pred_fallthru
          _
        // Predicated region
        $region29: #{tpu_custom_call.1} parent=11 // pred_check
          %p210 = pneg %p147
        $region30: #{tpu_custom_call.1} parent=11 // pred_check_branch
          %212 = sbr.rel (%p210) target = $region32
        $region31: #{tpu_custom_call.1} parent=11 // pred_region
          _
        $region32: #{tpu_custom_call.1} parent=11 // pred_fallthru
          _
      $region12: #{tpu_custom_call.1} parent=5 // pred_fallthru
        _
      %p213 = scmp.lt.s32.totalorder %s16, 2
      // Predicated region
      $region33: #{tpu_custom_call.1} parent=5 // pred_check
        %p214 = pneg %p213
      $region34: #{tpu_custom_call.1} parent=5 // pred_check_branch
        %216 = sbr.rel (%p214) target = $region36
      $region35: #{tpu_custom_call.1} parent=5 // pred_region
        // Predicated region
        $region37: #{tpu_custom_call.1} parent=35 // pred_check
          %p217 = pneg %p36
        $region38: #{tpu_custom_call.1} parent=35 // pred_check_branch
          %219 = sbr.rel (%p217) target = $region40
        $region39: #{tpu_custom_call.1} parent=35 // pred_region
          %s220 = smul.u32 2, %s16
          %p221 = scmp.lt.s32.totalorder %s220, 3
          %s222 = scalar_select %p221, %s220, 3
          %s223 = smul.addr %s222, 4
          %s224 = scalar_lea.vmem %s0, %s223
          %s225 = smul.u32 2, %s16
        $region40: #{tpu_custom_call.1} parent=35 // pred_fallthru
          _
      $region36: #{tpu_custom_call.1} parent=5 // pred_fallthru
        _
      %p226 = scmp.le.s32.totalorder 1, %s16
      %p227 = scmp.lt.s32.totalorder %s16, 3
      %p228 = pnand %p226, %p227
      %p229 = pneg %p228
      // Predicated region
      $region41: #{tpu_custom_call.1} parent=5 // pred_check
        _
      $region42: #{tpu_custom_call.1} parent=5 // pred_check_branch
        %231 = sbr.rel (%p228) target = $region44
      $region43: #{tpu_custom_call.1} parent=5 // pred_region
        %s232 = ssub.s32 %s16, 1
        // Predicated region
        $region45: #{tpu_custom_call.1} parent=43 // pred_check
          %p233 = pneg %p126
        $region46: #{tpu_custom_call.1} parent=43 // pred_check_branch
          %235 = sbr.rel (%p233) target = $region48
        $region47: #{tpu_custom_call.1} parent=43 // pred_region
          %236 = dma.done [#allocation3], 256
        $region48: #{tpu_custom_call.1} parent=43 // pred_fallthru
          _
        %s237 = smul.u32 2, %s21
        %p238 = scmp.lt.s32.totalorder %s237, 3
        %s239 = scalar_select %p238, %s237, 3
        %s240 = smul.addr %s239, 4
        %s241 = scalar_lea.vmem %s0, %s240
        %p242 = pneg %p42
        %p243 = pneg %p39
        %p244 = pneg %p63
        %p245 = pneg %p60
        %p246 = pneg %p84
        %p247 = pneg %p81
        %p248 = pneg %p105
        %p249 = pneg %p102
        %p250 = pneg %p126
        %p251 = pneg %p123
        %p252 = pneg %p147
        %p253 = pneg %p144
        %p254 = pneg %p173
        %p255 = pneg %p170
        %s256 = sand.u32 %s160, 1
        %s257 = scalar_lea.sflag [#allocation4], %s256
        %s258 = sand.u32 %s160, 1
        %s259 = smul.addr %s258, 16
        %s260 = scalar_lea.vmem [#allocation5], %s259
        %s261 = smul.u32 2, %s21
        %p262 = scmp.lt.s32.totalorder %s261, 3
        %s263 = scalar_select %p262, %s261, 3
        %s264 = smul.addr %s263, 4
        %s265 = scalar_lea.vmem %s0, %s264
        %s266 = smul.u32 2, %s21
        %s267 = smul.u32 2, %s21
        %v268 = vld [vmem:[%s1] sm:$0x3]
        %s269 = scalar_lea.vmem %s1, 2
        %v270 = vld [vmem:[%s269] sm:$0x3]
        %s271 = scalar_lea.vmem %s1, 4
        %v272 = vld [vmem:[%s271] sm:$0x3]
        %s273 = scalar_lea.vmem %s1, 6
        %v274 = vld [vmem:[%s273] sm:$0x3]
        %s275 = scalar_lea.vmem %s1, 8
        %v276 = vld [vmem:[%s275] sm:$0x3]
        %s277 = scalar_lea.vmem %s1, 10
        %v278 = vld [vmem:[%s277] sm:$0x3]
        %s279 = scalar_lea.vmem %s1, 12
        %v280 = vld [vmem:[%s279] sm:$0x3]
        %s281 = scalar_lea.vmem %s1, 14
        %v282 = vld [vmem:[%s281] sm:$0x3]
        %s283 = scalar_lea.vmem %s1, 16
        %v284 = vld [vmem:[%s283] sm:$0x3]
        %v285 = vld [vmem:[%s2] sm:$0xff]
        %v286 = vld [vmem:[%s3] sm:$0xff]
        %v287 = vld [vmem:[#allocation2] sm:$0xff]
        %v288 = vld [vmem:[%s5] sm:$0xff]
        %s289 = scalar_lea.vmem [#allocation2], 8
        %v290 = vld [vmem:[%s289] sm:$0xff]
        %s291 = scalar_lea.vmem %s5, 8
        %v292 = vld [vmem:[%s291] sm:$0xff]
        %v293 = vld [vmem:[%s265] sm:$0xff]
        %295 = vset.pattern.permute.xlu0 0
        %296 = vperm.xlu0 %295, %v286
        %v297 = vpop.permute.xlu0 %296
        %v300 = vcombine.high %v293, %v293
        %vm301 = vcmask 31744
        %v303 = vsel %vm301, %v285, 0
        %vm305 = vcmask 1043456
        %v306 = vsel %vm305, %v293, 0
        %v308 = vsel %vm305, %v300, 0
        %310 = vmatprep.subr.mxu0 0.0
        %311 = vmatpush1.msra.mxu0 0.0
        %312 = vmatprep.subr.mxu0 0.0
        %313 = vmatpush1.msra.mxu0 0.0
        %314 = vmatprep.subr.mxu0 0.0
        %315 = vmatpush1.msra.mxu0 0.0
        %316 = vmatprep.subr.mxu0 0.0
        %317 = vmatpush1.msra.mxu0 0.0
        %318 = vmatprep.subr.mxu0 0.0
        %319 = vmatpush1.msra.mxu0 0.0
        %320 = vmatprep.subr.mxu0 0.0
        %321 = vmatpush1.msra.mxu0 0.0
        %322 = vmatprep.subr.mxu0 0.0
        %323 = vmatpush1.msra.mxu0 0.0
        %324 = vmatprep.subr.mxu0 0.0
        %325 = vmatpush1.msra.mxu0 0.0
        %326 = vmatprep.subr.mxu0 0.0
        %327 = vmatpush1.msra.mxu0 0.0
        %328 = vmatprep.subr.mxu0 0.0
        %329 = vmatpush1.msra.mxu0 0.0
        %330 = vmatprep.subr.mxu0 0.0
        %331 = vmatpush1.msra.mxu0 0.0
        %332 = vmatprep.subr.mxu0 0.0
        %333 = vmatpush1.msra.mxu0 0.0
        %334 = vmatprep.subr.mxu0 0.0
        %335 = vmatpush1.msra.mxu0 0.0
        %336 = vmatprep.subr.mxu0 0.0
        %337 = vmatpush1.msra.mxu0 0.0
        %338 = vmatprep.subr.mxu0 0.0
        %339 = vmatpush1.msra.mxu0 0.0
        %340 = vmatprep.subr.mxu0 %v308
        %341 = vmatpush1.msra.mxu0 %v306
        %342 = vmatprep.subr.mxu0 0.0
        %343 = vmatpush2.msra.mxu0 0.0
        %344 = vmatprep.subr.mxu0 0.0
        %345 = vmatpush2.msra.mxu0 0.0
        %346 = vmatprep.subr.mxu0 0.0
        %347 = vmatpush2.msra.mxu0 0.0
        %348 = vmatprep.subr.mxu0 0.0
        %349 = vmatpush2.msra.mxu0 0.0
        %350 = vmatprep.subr.mxu0 0.0
        %351 = vmatpush2.msra.mxu0 0.0
        %352 = vmatprep.subr.mxu0 0.0
        %353 = vmatpush2.msra.mxu0 0.0
        %354 = vmatprep.subr.mxu0 0.0
        %355 = vmatpush2.msra.mxu0 0.0
        %356 = vmatprep.subr.mxu0 0.0
        %357 = vmatpush2.msra.mxu0 0.0
        %358 = vmatprep.subr.mxu0 0.0
        %359 = vmatpush2.msra.mxu0 0.0
        %360 = vmatprep.subr.mxu0 0.0
        %361 = vmatpush2.msra.mxu0 0.0
        %362 = vmatprep.subr.mxu0 0.0
        %363 = vmatpush2.msra.mxu0 0.0
        %364 = vmatprep.subr.mxu0 0.0
        %365 = vmatpush2.msra.mxu0 0.0
        %366 = vmatprep.subr.mxu0 0.0
        %367 = vmatpush2.msra.mxu0 0.0
        %368 = vmatprep.subr.mxu0 0.0
        %369 = vmatpush2.msra.mxu0 0.0
        %370 = vmatprep.subr.mxu0 0.0
        %371 = vmatpush2.msra.mxu0 0.0
        %372 = vmatprep.subr.mxu0 0.0
        %373 = vmatpush2.msra.mxu0 0.0
        %374 = vmatprep.mubr.f32.mxu0 0.0
        %375 = vmatmul.mubr.f32.gmra.mxu0 %v303
        %v376 = vpop.f32.mrf.mxu0
        %v377 = vadd.f32 %v297, %v376
        %v378 = vpop.f32.mrf.mxu0
        %v379 = vadd.f32 %v297, %v378
        %380 = vdwg.mxu0
        %381 = vrot.lane.b32.xlu0 %v377, 17
        %v382 = vpop.permute.xlu0 %381
        %383 = vrot.lane.b32.xlu0 %v379, 17
        %v384 = vpop.permute.xlu0 %383
        %v385 = vlaneseq
        %v386 = vand.u32 %v385, 127
        %vm387 = vcmp.lt.s32.totalorder %v386, 17
        %v388 = vsel %vm387, %v382, %v384
        %v389 = vsel %vm387, %v384, %v382
        %v391 = vlaneseq
        %v392 = vshrl.u32 %v391, 7
        %v393 = vsub.s32 0, %v392
        %v394 = vrot.slane %v268, %v393
        %v395 = vlaneseq
        %v396 = vshrl.u32 %v395, 7
        %v397 = vsub.s32 1, %v396
        %v398 = vrot.slane %v268, %v397
        %v401 = vmul.f32 %v389, %v394
        %v402 = vmul.f32 %v388, %v398
        %403 = vrot.lane.b32.xlu0 %v377, 16
        %v404 = vpop.permute.xlu0 %403
        %405 = vrot.lane.b32.xlu0 %v379, 16
        %v406 = vpop.permute.xlu0 %405
        %vm407 = vcmp.lt.s32.totalorder %v386, 16
        %v408 = vsel %vm407, %v404, %v406
        %v409 = vsel %vm407, %v406, %v404
        %v411 = vlaneseq
        %v412 = vshrl.u32 %v411, 7
        %v413 = vsub.s32 0, %v412
        %v414 = vrot.slane %v270, %v413
        %v415 = vlaneseq
        %v416 = vshrl.u32 %v415, 7
        %v417 = vsub.s32 1, %v416
        %v418 = vrot.slane %v270, %v417
        %v421 = vmul.f32 %v409, %v414
        %v422 = vmul.f32 %v408, %v418
        %423 = vrot.lane.b32.xlu0 %v377, 15
        %v424 = vpop.permute.xlu0 %423
        %425 = vrot.lane.b32.xlu0 %v379, 15
        %v426 = vpop.permute.xlu0 %425
        %vm427 = vcmp.lt.s32.totalorder %v386, 15
        %v428 = vsel %vm427, %v424, %v426
        %v429 = vsel %vm427, %v426, %v424
        %v431 = vlaneseq
        %v432 = vshrl.u32 %v431, 7
        %v433 = vsub.s32 0, %v432
        %v434 = vrot.slane %v272, %v433
        %v435 = vlaneseq
        %v436 = vshrl.u32 %v435, 7
        %v437 = vsub.s32 1, %v436
        %v438 = vrot.slane %v272, %v437
        %v441 = vmul.f32 %v429, %v434
        %v442 = vmul.f32 %v428, %v438
        %443 = vrot.lane.b32.xlu0 %v377, 1
        %v444 = vpop.permute.xlu0 %443
        %445 = vrot.lane.b32.xlu0 %v379, 1
        %v446 = vpop.permute.xlu0 %445
        %vm447 = vcmp.lt.s32.totalorder %v386, 1
        %v448 = vsel %vm447, %v444, %v446
        %v449 = vsel %vm447, %v446, %v444
        %v451 = vlaneseq
        %v452 = vshrl.u32 %v451, 7
        %v453 = vsub.s32 0, %v452
        %v454 = vrot.slane %v274, %v453
        %v455 = vlaneseq
        %v456 = vshrl.u32 %v455, 7
        %v457 = vsub.s32 1, %v456
        %v458 = vrot.slane %v274, %v457
        %v461 = vmul.f32 %v449, %v454
        %v462 = vmul.f32 %v448, %v458
        %v464 = vlaneseq
        %v465 = vshrl.u32 %v464, 7
        %v466 = vsub.s32 0, %v465
        %v467 = vrot.slane %v276, %v466
        %v468 = vlaneseq
        %v469 = vshrl.u32 %v468, 7
        %v470 = vsub.s32 1, %v469
        %v471 = vrot.slane %v276, %v470
        %v474 = vmul.f32 %v377, %v467
        %v475 = vmul.f32 %v379, %v471
        %476 = vrot.lane.b32.xlu0 %v377, 127
        %v477 = vpop.permute.xlu0 %476
        %478 = vrot.lane.b32.xlu0 %v379, 127
        %v479 = vpop.permute.xlu0 %478
        %vm480 = vcmp.lt.s32.totalorder %v386, 127
        %v481 = vsel %vm480, %v477, %v479
        %v482 = vsel %vm480, %v479, %v477
        %v484 = vlaneseq
        %v485 = vshrl.u32 %v484, 7
        %v486 = vsub.s32 0, %v485
        %v487 = vrot.slane %v278, %v486
        %v488 = vlaneseq
        %v489 = vshrl.u32 %v488, 7
        %v490 = vsub.s32 1, %v489
        %v491 = vrot.slane %v278, %v490
        %v494 = vmul.f32 %v481, %v487
        %v495 = vmul.f32 %v482, %v491
        %496 = vrot.lane.b32.xlu0 %v377, 113
        %v497 = vpop.permute.xlu0 %496
        %498 = vrot.lane.b32.xlu0 %v379, 113
        %v499 = vpop.permute.xlu0 %498
        %vm500 = vcmp.lt.s32.totalorder %v386, 113
        %v501 = vsel %vm500, %v497, %v499
        %v502 = vsel %vm500, %v499, %v497
        %v504 = vlaneseq
        %v505 = vshrl.u32 %v504, 7
        %v506 = vsub.s32 0, %v505
        %v507 = vrot.slane %v280, %v506
        %v508 = vlaneseq
        %v509 = vshrl.u32 %v508, 7
        %v510 = vsub.s32 1, %v509
        %v511 = vrot.slane %v280, %v510
        %v514 = vmul.f32 %v501, %v507
        %v515 = vmul.f32 %v502, %v511
        %516 = vrot.lane.b32.xlu0 %v377, 112
        %v517 = vpop.permute.xlu0 %516
        %518 = vrot.lane.b32.xlu0 %v379, 112
        %v519 = vpop.permute.xlu0 %518
        %vm520 = vcmp.lt.s32.totalorder %v386, 112
        %v521 = vsel %vm520, %v517, %v519
        %v522 = vsel %vm520, %v519, %v517
        %v524 = vlaneseq
        %v525 = vshrl.u32 %v524, 7
        %v526 = vsub.s32 0, %v525
        %v527 = vrot.slane %v282, %v526
        %v528 = vlaneseq
        %v529 = vshrl.u32 %v528, 7
        %v530 = vsub.s32 1, %v529
        %v531 = vrot.slane %v282, %v530
        %v534 = vmul.f32 %v521, %v527
        %v535 = vmul.f32 %v522, %v531
        %536 = vrot.lane.b32.xlu0 %v377, 111
        %v537 = vpop.permute.xlu0 %536
        %538 = vrot.lane.b32.xlu0 %v379, 111
        %v539 = vpop.permute.xlu0 %538
        %vm540 = vcmp.lt.s32.totalorder %v386, 111
        %v541 = vsel %vm540, %v537, %v539
        %v542 = vsel %vm540, %v539, %v537
        %v544 = vlaneseq
        %v545 = vshrl.u32 %v544, 7
        %v546 = vsub.s32 0, %v545
        %v547 = vrot.slane %v284, %v546
        %v548 = vlaneseq
        %v549 = vshrl.u32 %v548, 7
        %v550 = vsub.s32 1, %v549
        %v551 = vrot.slane %v284, %v550
        %v554 = vmul.f32 %v541, %v547
        %v555 = vmul.f32 %v542, %v551
        %557 = vset.pattern.permute.xlu0 0
        %558 = vperm.xlu0 %557, %v288
        %v559 = vpop.permute.xlu0 %558
        %vm561 = vcmask 588800
        %v563 = vsel %vm561, %v287, 0
        %565 = vmatprep.subr.mxu0 0.0
        %566 = vmatpush1.msra.mxu0 0.0
        %567 = vmatprep.subr.mxu0 0.0
        %568 = vmatpush1.msra.mxu0 0.0
        %569 = vmatprep.subr.mxu0 0.0
        %570 = vmatpush1.msra.mxu0 0.0
        %571 = vmatprep.subr.mxu0 0.0
        %572 = vmatpush1.msra.mxu0 0.0
        %573 = vmatprep.subr.mxu0 0.0
        %574 = vmatpush1.msra.mxu0 0.0
        %575 = vmatprep.subr.mxu0 0.0
        %576 = vmatpush1.msra.mxu0 0.0
        %577 = vmatprep.subr.mxu0 0.0
        %578 = vmatpush1.msra.mxu0 0.0
        %579 = vmatprep.subr.mxu0 %v555
        %580 = vmatpush1.msra.mxu0 %v554
        %581 = vmatprep.subr.mxu0 %v535
        %582 = vmatpush1.msra.mxu0 %v534
        %583 = vmatprep.subr.mxu0 %v515
        %584 = vmatpush1.msra.mxu0 %v514
        %585 = vmatprep.subr.mxu0 %v495
        %586 = vmatpush1.msra.mxu0 %v494
        %587 = vmatprep.subr.mxu0 %v475
        %588 = vmatpush1.msra.mxu0 %v474
        %589 = vmatprep.subr.mxu0 %v462
        %590 = vmatpush1.msra.mxu0 %v461
        %591 = vmatprep.subr.mxu0 %v442
        %592 = vmatpush1.msra.mxu0 %v441
        %593 = vmatprep.subr.mxu0 %v422
        %594 = vmatpush1.msra.mxu0 %v421
        %595 = vmatprep.subr.mxu0 %v402
        %596 = vmatpush1.msra.mxu0 %v401
        %597 = vmatprep.subr.mxu0 0.0
        %598 = vmatpush2.msra.mxu0 0.0
        %599 = vmatprep.subr.mxu0 0.0
        %600 = vmatpush2.msra.mxu0 0.0
        %601 = vmatprep.subr.mxu0 0.0
        %602 = vmatpush2.msra.mxu0 0.0
        %603 = vmatprep.subr.mxu0 0.0
        %604 = vmatpush2.msra.mxu0 0.0
        %605 = vmatprep.subr.mxu0 0.0
        %606 = vmatpush2.msra.mxu0 0.0
        %607 = vmatprep.subr.mxu0 0.0
        %608 = vmatpush2.msra.mxu0 0.0
        %609 = vmatprep.subr.mxu0 0.0
        %610 = vmatpush2.msra.mxu0 0.0
        %611 = vmatprep.subr.mxu0 0.0
        %612 = vmatpush2.msra.mxu0 0.0
        %613 = vmatprep.subr.mxu0 0.0
        %614 = vmatpush2.msra.mxu0 0.0
        %615 = vmatprep.subr.mxu0 0.0
        %616 = vmatpush2.msra.mxu0 0.0
        %617 = vmatprep.subr.mxu0 0.0
        %618 = vmatpush2.msra.mxu0 0.0
        %619 = vmatprep.subr.mxu0 0.0
        %620 = vmatpush2.msra.mxu0 0.0
        %621 = vmatprep.subr.mxu0 0.0
        %622 = vmatpush2.msra.mxu0 0.0
        %623 = vmatprep.subr.mxu0 0.0
        %624 = vmatpush2.msra.mxu0 0.0
        %625 = vmatprep.subr.mxu0 0.0
        %626 = vmatpush2.msra.mxu0 0.0
        %627 = vmatprep.subr.mxu0 0.0
        %628 = vmatpush2.msra.mxu0 0.0
        %629 = vmatprep.mubr.f32.mxu0 0.0
        %630 = vmatmul.mubr.f32.gmra.mxu0 %v563
        %v631 = vpop.f32.mrf.mxu0
        %v632 = vadd.f32 %v559, %v631
        %v633 = vpop.f32.mrf.mxu0
        %v634 = vadd.f32 %v559, %v633
        %635 = vdwg.mxu0
        %v636 = vmax.f32 %v632, 0.0
        %v637 = vmax.f32 %v634, 0.0
        %v638 = vadd.f32 %v377, %v636
        %v639 = vadd.f32 %v379, %v637
        %640 = vrot.lane.b32.xlu0 %v638, 17
        %v641 = vpop.permute.xlu0 %640
        %642 = vrot.lane.b32.xlu0 %v639, 17
        %v643 = vpop.permute.xlu0 %642
        %v644 = vsel %vm387, %v641, %v643
        %v645 = vsel %vm387, %v643, %v641
        %v646 = vmul.f32 %v645, %v394
        %v647 = vmul.f32 %v644, %v398
        %648 = vrot.lane.b32.xlu0 %v638, 16
        %v649 = vpop.permute.xlu0 %648
        %650 = vrot.lane.b32.xlu0 %v639, 16
        %v651 = vpop.permute.xlu0 %650
        %v652 = vsel %vm407, %v649, %v651
        %v653 = vsel %vm407, %v651, %v649
        %v654 = vmul.f32 %v653, %v414
        %v655 = vmul.f32 %v652, %v418
        %656 = vrot.lane.b32.xlu0 %v638, 15
        %v657 = vpop.permute.xlu0 %656
        %658 = vrot.lane.b32.xlu0 %v639, 15
        %v659 = vpop.permute.xlu0 %658
        %v660 = vsel %vm427, %v657, %v659
        %v661 = vsel %vm427, %v659, %v657
        %v662 = vmul.f32 %v661, %v434
        %v663 = vmul.f32 %v660, %v438
        %664 = vrot.lane.b32.xlu0 %v638, 1
        %v665 = vpop.permute.xlu0 %664
        %666 = vrot.lane.b32.xlu0 %v639, 1
        %v667 = vpop.permute.xlu0 %666
        %v668 = vsel %vm447, %v665, %v667
        %v669 = vsel %vm447, %v667, %v665
        %v670 = vmul.f32 %v669, %v454
        %v671 = vmul.f32 %v668, %v458
        %v672 = vmul.f32 %v638, %v467
        %v673 = vmul.f32 %v639, %v471
        %674 = vrot.lane.b32.xlu0 %v638, 127
        %v675 = vpop.permute.xlu0 %674
        %676 = vrot.lane.b32.xlu0 %v639, 127
        %v677 = vpop.permute.xlu0 %676
        %v678 = vsel %vm480, %v675, %v677
        %v679 = vsel %vm480, %v677, %v675
        %v680 = vmul.f32 %v678, %v487
        %v681 = vmul.f32 %v679, %v491
        %682 = vrot.lane.b32.xlu0 %v638, 113
        %v683 = vpop.permute.xlu0 %682
        %684 = vrot.lane.b32.xlu0 %v639, 113
        %v685 = vpop.permute.xlu0 %684
        %v686 = vsel %vm500, %v683, %v685
        %v687 = vsel %vm500, %v685, %v683
        %v688 = vmul.f32 %v686, %v507
        %v689 = vmul.f32 %v687, %v511
        %690 = vrot.lane.b32.xlu0 %v638, 112
        %v691 = vpop.permute.xlu0 %690
        %692 = vrot.lane.b32.xlu0 %v639, 112
        %v693 = vpop.permute.xlu0 %692
        %v694 = vsel %vm520, %v691, %v693
        %v695 = vsel %vm520, %v693, %v691
        %v696 = vmul.f32 %v694, %v527
        %v697 = vmul.f32 %v695, %v531
        %698 = vrot.lane.b32.xlu0 %v638, 111
        %v699 = vpop.permute.xlu0 %698
        %700 = vrot.lane.b32.xlu0 %v639, 111
        %v701 = vpop.permute.xlu0 %700
        %v702 = vsel %vm540, %v699, %v701
        %v703 = vsel %vm540, %v701, %v699
        %v704 = vmul.f32 %v702, %v547
        %v705 = vmul.f32 %v703, %v551
        %706 = vmatprep.subr.mxu0 0.0
        %707 = vmatpush1.msra.mxu0 0.0
        %708 = vmatprep.subr.mxu0 0.0
        %709 = vmatpush1.msra.mxu0 0.0
        %710 = vmatprep.subr.mxu0 0.0
        %711 = vmatpush1.msra.mxu0 0.0
        %712 = vmatprep.subr.mxu0 0.0
        %713 = vmatpush1.msra.mxu0 0.0
        %714 = vmatprep.subr.mxu0 0.0
        %715 = vmatpush1.msra.mxu0 0.0
        %716 = vmatprep.subr.mxu0 0.0
        %717 = vmatpush1.msra.mxu0 0.0
        %718 = vmatprep.subr.mxu0 0.0
        %719 = vmatpush1.msra.mxu0 0.0
        %720 = vmatprep.subr.mxu0 %v705
        %721 = vmatpush1.msra.mxu0 %v704
        %722 = vmatprep.subr.mxu0 %v697
        %723 = vmatpush1.msra.mxu0 %v696
        %724 = vmatprep.subr.mxu0 %v689
        %725 = vmatpush1.msra.mxu0 %v688
        %726 = vmatprep.subr.mxu0 %v681
        %727 = vmatpush1.msra.mxu0 %v680
        %728 = vmatprep.subr.mxu0 %v673
        %729 = vmatpush1.msra.mxu0 %v672
        %730 = vmatprep.subr.mxu0 %v671
        %731 = vmatpush1.msra.mxu0 %v670
        %732 = vmatprep.subr.mxu0 %v663
        %733 = vmatpush1.msra.mxu0 %v662
        %734 = vmatprep.subr.mxu0 %v655
        %735 = vmatpush1.msra.mxu0 %v654
        %736 = vmatprep.subr.mxu0 %v647
        %737 = vmatpush1.msra.mxu0 %v646
        %738 = vmatprep.subr.mxu0 0.0
        %739 = vmatpush2.msra.mxu0 0.0
        %740 = vmatprep.subr.mxu0 0.0
        %741 = vmatpush2.msra.mxu0 0.0
        %742 = vmatprep.subr.mxu0 0.0
        %743 = vmatpush2.msra.mxu0 0.0
        %744 = vmatprep.subr.mxu0 0.0
        %745 = vmatpush2.msra.mxu0 0.0
        %746 = vmatprep.subr.mxu0 0.0
        %747 = vmatpush2.msra.mxu0 0.0
        %748 = vmatprep.subr.mxu0 0.0
        %749 = vmatpush2.msra.mxu0 0.0
        %750 = vmatprep.subr.mxu0 0.0
        %751 = vmatpush2.msra.mxu0 0.0
        %752 = vmatprep.subr.mxu0 0.0
        %753 = vmatpush2.msra.mxu0 0.0
        %754 = vmatprep.subr.mxu0 0.0
        %755 = vmatpush2.msra.mxu0 0.0
        %756 = vmatprep.subr.mxu0 0.0
        %757 = vmatpush2.msra.mxu0 0.0
        %758 = vmatprep.subr.mxu0 0.0
        %759 = vmatpush2.msra.mxu0 0.0
        %760 = vmatprep.subr.mxu0 0.0
        %761 = vmatpush2.msra.mxu0 0.0
        %762 = vmatprep.subr.mxu0 0.0
        %763 = vmatpush2.msra.mxu0 0.0
        %764 = vmatprep.subr.mxu0 0.0
        %765 = vmatpush2.msra.mxu0 0.0
        %766 = vmatprep.subr.mxu0 0.0
        %767 = vmatpush2.msra.mxu0 0.0
        %768 = vmatprep.subr.mxu0 0.0
        %769 = vmatpush2.msra.mxu0 0.0
        %770 = vmatprep.mubr.f32.mxu0 0.0
        %771 = vmatmul.mubr.f32.gmra.mxu0 %v563
        %v772 = vpop.f32.mrf.mxu0
        %v773 = vadd.f32 %v559, %v772
        %v774 = vpop.f32.mrf.mxu0
        %v775 = vadd.f32 %v559, %v774
        %776 = vdwg.mxu0
        %v777 = vmax.f32 %v773, 0.0
        %v778 = vmax.f32 %v775, 0.0
        %v779 = vadd.f32 %v377, %v777
        %v780 = vadd.f32 %v379, %v778
        %781 = vrot.lane.b32.xlu0 %v779, 17
        %v782 = vpop.permute.xlu0 %781
        %783 = vrot.lane.b32.xlu0 %v780, 17
        %v784 = vpop.permute.xlu0 %783
        %v785 = vsel %vm387, %v782, %v784
        %v786 = vsel %vm387, %v784, %v782
        %v787 = vmul.f32 %v786, %v394
        %v788 = vmul.f32 %v785, %v398
        %789 = vrot.lane.b32.xlu0 %v779, 16
        %v790 = vpop.permute.xlu0 %789
        %791 = vrot.lane.b32.xlu0 %v780, 16
        %v792 = vpop.permute.xlu0 %791
        %v793 = vsel %vm407, %v790, %v792
        %v794 = vsel %vm407, %v792, %v790
        %v795 = vmul.f32 %v794, %v414
        %v796 = vmul.f32 %v793, %v418
        %797 = vrot.lane.b32.xlu0 %v779, 15
        %v798 = vpop.permute.xlu0 %797
        %799 = vrot.lane.b32.xlu0 %v780, 15
        %v800 = vpop.permute.xlu0 %799
        %v801 = vsel %vm427, %v798, %v800
        %v802 = vsel %vm427, %v800, %v798
        %v803 = vmul.f32 %v802, %v434
        %v804 = vmul.f32 %v801, %v438
        %805 = vrot.lane.b32.xlu0 %v779, 1
        %v806 = vpop.permute.xlu0 %805
        %807 = vrot.lane.b32.xlu0 %v780, 1
        %v808 = vpop.permute.xlu0 %807
        %v809 = vsel %vm447, %v806, %v808
        %v810 = vsel %vm447, %v808, %v806
        %v811 = vmul.f32 %v810, %v454
        %v812 = vmul.f32 %v809, %v458
        %v813 = vmul.f32 %v779, %v467
        %v814 = vmul.f32 %v780, %v471
        %815 = vrot.lane.b32.xlu0 %v779, 127
        %v816 = vpop.permute.xlu0 %815
        %817 = vrot.lane.b32.xlu0 %v780, 127
        %v818 = vpop.permute.xlu0 %817
        %v819 = vsel %vm480, %v816, %v818
        %v820 = vsel %vm480, %v818, %v816
        %v821 = vmul.f32 %v819, %v487
        %v822 = vmul.f32 %v820, %v491
        %823 = vrot.lane.b32.xlu0 %v779, 113
        %v824 = vpop.permute.xlu0 %823
        %825 = vrot.lane.b32.xlu0 %v780, 113
        %v826 = vpop.permute.xlu0 %825
        %v827 = vsel %vm500, %v824, %v826
        %v828 = vsel %vm500, %v826, %v824
        %v829 = vmul.f32 %v827, %v507
        %v830 = vmul.f32 %v828, %v511
        %831 = vrot.lane.b32.xlu0 %v779, 112
        %v832 = vpop.permute.xlu0 %831
        %833 = vrot.lane.b32.xlu0 %v780, 112
        %v834 = vpop.permute.xlu0 %833
        %v835 = vsel %vm520, %v832, %v834
        %v836 = vsel %vm520, %v834, %v832
        %v837 = vmul.f32 %v835, %v527
        %v838 = vmul.f32 %v836, %v531
        %839 = vrot.lane.b32.xlu0 %v779, 111
        %v840 = vpop.permute.xlu0 %839
        %841 = vrot.lane.b32.xlu0 %v780, 111
        %v842 = vpop.permute.xlu0 %841
        %v843 = vsel %vm540, %v840, %v842
        %v844 = vsel %vm540, %v842, %v840
        %v845 = vmul.f32 %v843, %v547
        %v846 = vmul.f32 %v844, %v551
        %847 = vmatprep.subr.mxu0 0.0
        %848 = vmatpush1.msra.mxu0 0.0
        %849 = vmatprep.subr.mxu0 0.0
        %850 = vmatpush1.msra.mxu0 0.0
        %851 = vmatprep.subr.mxu0 0.0
        %852 = vmatpush1.msra.mxu0 0.0
        %853 = vmatprep.subr.mxu0 0.0
        %854 = vmatpush1.msra.mxu0 0.0
        %855 = vmatprep.subr.mxu0 0.0
        %856 = vmatpush1.msra.mxu0 0.0
        %857 = vmatprep.subr.mxu0 0.0
        %858 = vmatpush1.msra.mxu0 0.0
        %859 = vmatprep.subr.mxu0 0.0
        %860 = vmatpush1.msra.mxu0 0.0
        %861 = vmatprep.subr.mxu0 %v846
        %862 = vmatpush1.msra.mxu0 %v845
        %863 = vmatprep.subr.mxu0 %v838
        %864 = vmatpush1.msra.mxu0 %v837
        %865 = vmatprep.subr.mxu0 %v830
        %866 = vmatpush1.msra.mxu0 %v829
        %867 = vmatprep.subr.mxu0 %v822
        %868 = vmatpush1.msra.mxu0 %v821
        %869 = vmatprep.subr.mxu0 %v814
        %870 = vmatpush1.msra.mxu0 %v813
        %871 = vmatprep.subr.mxu0 %v812
        %872 = vmatpush1.msra.mxu0 %v811
        %873 = vmatprep.subr.mxu0 %v804
        %874 = vmatpush1.msra.mxu0 %v803
        %875 = vmatprep.subr.mxu0 %v796
        %876 = vmatpush1.msra.mxu0 %v795
        %877 = vmatprep.subr.mxu0 %v788
        %878 = vmatpush1.msra.mxu0 %v787
        %879 = vmatprep.subr.mxu0 0.0
        %880 = vmatpush2.msra.mxu0 0.0
        %881 = vmatprep.subr.mxu0 0.0
        %882 = vmatpush2.msra.mxu0 0.0
        %883 = vmatprep.subr.mxu0 0.0
        %884 = vmatpush2.msra.mxu0 0.0
        %885 = vmatprep.subr.mxu0 0.0
        %886 = vmatpush2.msra.mxu0 0.0
        %887 = vmatprep.subr.mxu0 0.0
        %888 = vmatpush2.msra.mxu0 0.0
        %889 = vmatprep.subr.mxu0 0.0
        %890 = vmatpush2.msra.mxu0 0.0
        %891 = vmatprep.subr.mxu0 0.0
        %892 = vmatpush2.msra.mxu0 0.0
        %893 = vmatprep.subr.mxu0 0.0
        %894 = vmatpush2.msra.mxu0 0.0
        %895 = vmatprep.subr.mxu0 0.0
        %896 = vmatpush2.msra.mxu0 0.0
        %897 = vmatprep.subr.mxu0 0.0
        %898 = vmatpush2.msra.mxu0 0.0
        %899 = vmatprep.subr.mxu0 0.0
        %900 = vmatpush2.msra.mxu0 0.0
        %901 = vmatprep.subr.mxu0 0.0
        %902 = vmatpush2.msra.mxu0 0.0
        %903 = vmatprep.subr.mxu0 0.0
        %904 = vmatpush2.msra.mxu0 0.0
        %905 = vmatprep.subr.mxu0 0.0
        %906 = vmatpush2.msra.mxu0 0.0
        %907 = vmatprep.subr.mxu0 0.0
        %908 = vmatpush2.msra.mxu0 0.0
        %909 = vmatprep.subr.mxu0 0.0
        %910 = vmatpush2.msra.mxu0 0.0
        %911 = vmatprep.mubr.f32.mxu0 0.0
        %912 = vmatmul.mubr.f32.gmra.mxu0 %v563
        %v913 = vpop.f32.mrf.mxu0
        %v914 = vadd.f32 %v559, %v913
        %v915 = vpop.f32.mrf.mxu0
        %v916 = vadd.f32 %v559, %v915
        %917 = vdwg.mxu0
        %v918 = vmax.f32 %v914, 0.0
        %v919 = vmax.f32 %v916, 0.0
        %920 = vrot.lane.b32.xlu0 %v918, 17
        %v921 = vpop.permute.xlu0 %920
        %922 = vrot.lane.b32.xlu0 %v919, 17
        %v923 = vpop.permute.xlu0 %922
        %v924 = vsel %vm387, %v921, %v923
        %v925 = vsel %vm387, %v923, %v921
        %v926 = vmul.f32 %v925, %v394
        %v927 = vmul.f32 %v924, %v398
        %928 = vrot.lane.b32.xlu0 %v918, 16
        %v929 = vpop.permute.xlu0 %928
        %930 = vrot.lane.b32.xlu0 %v919, 16
        %v931 = vpop.permute.xlu0 %930
        %v932 = vsel %vm407, %v929, %v931
        %v933 = vsel %vm407, %v931, %v929
        %v934 = vmul.f32 %v933, %v414
        %v935 = vmul.f32 %v932, %v418
        %936 = vrot.lane.b32.xlu0 %v918, 15
        %v937 = vpop.permute.xlu0 %936
        %938 = vrot.lane.b32.xlu0 %v919, 15
        %v939 = vpop.permute.xlu0 %938
        %v940 = vsel %vm427, %v937, %v939
        %v941 = vsel %vm427, %v939, %v937
        %v942 = vmul.f32 %v941, %v434
        %v943 = vmul.f32 %v940, %v438
        %944 = vrot.lane.b32.xlu0 %v918, 1
        %v945 = vpop.permute.xlu0 %944
        %946 = vrot.lane.b32.xlu0 %v919, 1
        %v947 = vpop.permute.xlu0 %946
        %v948 = vsel %vm447, %v945, %v947
        %v949 = vsel %vm447, %v947, %v945
        %v950 = vmul.f32 %v949, %v454
        %v951 = vmul.f32 %v948, %v458
        %v952 = vmul.f32 %v918, %v467
        %v953 = vmul.f32 %v919, %v471
        %954 = vrot.lane.b32.xlu0 %v918, 127
        %v955 = vpop.permute.xlu0 %954
        %956 = vrot.lane.b32.xlu0 %v919, 127
        %v957 = vpop.permute.xlu0 %956
        %v958 = vsel %vm480, %v955, %v957
        %v959 = vsel %vm480, %v957, %v955
        %v960 = vmul.f32 %v958, %v487
        %v961 = vmul.f32 %v959, %v491
        %962 = vrot.lane.b32.xlu0 %v918, 113
        %v963 = vpop.permute.xlu0 %962
        %964 = vrot.lane.b32.xlu0 %v919, 113
        %v965 = vpop.permute.xlu0 %964
        %v966 = vsel %vm500, %v963, %v965
        %v967 = vsel %vm500, %v965, %v963
        %v968 = vmul.f32 %v966, %v507
        %v969 = vmul.f32 %v967, %v511
        %970 = vrot.lane.b32.xlu0 %v918, 112
        %v971 = vpop.permute.xlu0 %970
        %972 = vrot.lane.b32.xlu0 %v919, 112
        %v973 = vpop.permute.xlu0 %972
        %v974 = vsel %vm520, %v971, %v973
        %v975 = vsel %vm520, %v973, %v971
        %v976 = vmul.f32 %v974, %v527
        %v977 = vmul.f32 %v975, %v531
        %978 = vrot.lane.b32.xlu0 %v918, 111
        %v979 = vpop.permute.xlu0 %978
        %980 = vrot.lane.b32.xlu0 %v919, 111
        %v981 = vpop.permute.xlu0 %980
        %v982 = vsel %vm540, %v979, %v981
        %v983 = vsel %vm540, %v981, %v979
        %v984 = vmul.f32 %v982, %v547
        %v985 = vmul.f32 %v983, %v551
        %987 = vset.pattern.permute.xlu0 0
        %988 = vperm.xlu0 %987, %v292
        %v989 = vpop.permute.xlu0 %988
        %v992 = vsel %vm561, %v290, 0
        %994 = vmatprep.subr.mxu0 0.0
        %995 = vmatpush1.msra.mxu0 0.0
        %996 = vmatprep.subr.mxu0 0.0
        %997 = vmatpush1.msra.mxu0 0.0
        %998 = vmatprep.subr.mxu0 0.0
        %999 = vmatpush1.msra.mxu0 0.0
        %1000 = vmatprep.subr.mxu0 0.0
        %1001 = vmatpush1.msra.mxu0 0.0
        %1002 = vmatprep.subr.mxu0 0.0
        %1003 = vmatpush1.msra.mxu0 0.0
        %1004 = vmatprep.subr.mxu0 0.0
        %1005 = vmatpush1.msra.mxu0 0.0
        %1006 = vmatprep.subr.mxu0 0.0
        %1007 = vmatpush1.msra.mxu0 0.0
        %1008 = vmatprep.subr.mxu0 %v985
        %1009 = vmatpush1.msra.mxu0 %v984
        %1010 = vmatprep.subr.mxu0 %v977
        %1011 = vmatpush1.msra.mxu0 %v976
        %1012 = vmatprep.subr.mxu0 %v969
        %1013 = vmatpush1.msra.mxu0 %v968
        %1014 = vmatprep.subr.mxu0 %v961
        %1015 = vmatpush1.msra.mxu0 %v960
        %1016 = vmatprep.subr.mxu0 %v953
        %1017 = vmatpush1.msra.mxu0 %v952
        %1018 = vmatprep.subr.mxu0 %v951
        %1019 = vmatpush1.msra.mxu0 %v950
        %1020 = vmatprep.subr.mxu0 %v943
        %1021 = vmatpush1.msra.mxu0 %v942
        %1022 = vmatprep.subr.mxu0 %v935
        %1023 = vmatpush1.msra.mxu0 %v934
        %1024 = vmatprep.subr.mxu0 %v927
        %1025 = vmatpush1.msra.mxu0 %v926
        %1026 = vmatprep.subr.mxu0 0.0
        %1027 = vmatpush2.msra.mxu0 0.0
        %1028 = vmatprep.subr.mxu0 0.0
        %1029 = vmatpush2.msra.mxu0 0.0
        %1030 = vmatprep.subr.mxu0 0.0
        %1031 = vmatpush2.msra.mxu0 0.0
        %1032 = vmatprep.subr.mxu0 0.0
        %1033 = vmatpush2.msra.mxu0 0.0
        %1034 = vmatprep.subr.mxu0 0.0
        %1035 = vmatpush2.msra.mxu0 0.0
        %1036 = vmatprep.subr.mxu0 0.0
        %1037 = vmatpush2.msra.mxu0 0.0
        %1038 = vmatprep.subr.mxu0 0.0
        %1039 = vmatpush2.msra.mxu0 0.0
        %1040 = vmatprep.subr.mxu0 0.0
        %1041 = vmatpush2.msra.mxu0 0.0
        %1042 = vmatprep.subr.mxu0 0.0
        %1043 = vmatpush2.msra.mxu0 0.0
        %1044 = vmatprep.subr.mxu0 0.0
        %1045 = vmatpush2.msra.mxu0 0.0
        %1046 = vmatprep.subr.mxu0 0.0
        %1047 = vmatpush2.msra.mxu0 0.0
        %1048 = vmatprep.subr.mxu0 0.0
        %1049 = vmatpush2.msra.mxu0 0.0
        %1050 = vmatprep.subr.mxu0 0.0
        %1051 = vmatpush2.msra.mxu0 0.0
        %1052 = vmatprep.subr.mxu0 0.0
        %1053 = vmatpush2.msra.mxu0 0.0
        %1054 = vmatprep.subr.mxu0 0.0
        %1055 = vmatpush2.msra.mxu0 0.0
        %1056 = vmatprep.subr.mxu0 0.0
        %1057 = vmatpush2.msra.mxu0 0.0
        %1058 = vmatprep.mubr.f32.mxu0 0.0
        %1059 = vmatmul.mubr.f32.gmra.mxu0 %v992
        %v1060 = vpop.f32.mrf.mxu0
        %v1061 = vadd.f32 %v989, %v1060
        %v1062 = vpop.f32.mrf.mxu0
        %v1063 = vadd.f32 %v989, %v1062
        %1064 = vdwg.mxu0
        %v1065 = vmax.f32 %v1061, 0.0
        %v1066 = vmax.f32 %v1063, 0.0
        %v1067 = vadd.f32 %v918, %v1065
        %v1068 = vadd.f32 %v919, %v1066
        %1069 = vrot.lane.b32.xlu0 %v1067, 17
        %v1070 = vpop.permute.xlu0 %1069
        %1071 = vrot.lane.b32.xlu0 %v1068, 17
        %v1072 = vpop.permute.xlu0 %1071
        %v1073 = vsel %vm387, %v1070, %v1072
        %v1074 = vsel %vm387, %v1072, %v1070
        %v1075 = vmul.f32 %v1074, %v394
        %v1076 = vmul.f32 %v1073, %v398
        %1077 = vrot.lane.b32.xlu0 %v1067, 16
        %v1078 = vpop.permute.xlu0 %1077
        %1079 = vrot.lane.b32.xlu0 %v1068, 16
        %v1080 = vpop.permute.xlu0 %1079
        %v1081 = vsel %vm407, %v1078, %v1080
        %v1082 = vsel %vm407, %v1080, %v1078
        %v1083 = vmul.f32 %v1082, %v414
        %v1084 = vmul.f32 %v1081, %v418
        %1085 = vrot.lane.b32.xlu0 %v1067, 15
        %v1086 = vpop.permute.xlu0 %1085
        %1087 = vrot.lane.b32.xlu0 %v1068, 15
        %v1088 = vpop.permute.xlu0 %1087
        %v1089 = vsel %vm427, %v1086, %v1088
        %v1090 = vsel %vm427, %v1088, %v1086
        %v1091 = vmul.f32 %v1090, %v434
        %v1092 = vmul.f32 %v1089, %v438
        %1093 = vrot.lane.b32.xlu0 %v1067, 1
        %v1094 = vpop.permute.xlu0 %1093
        %1095 = vrot.lane.b32.xlu0 %v1068, 1
        %v1096 = vpop.permute.xlu0 %1095
        %v1097 = vsel %vm447, %v1094, %v1096
        %v1098 = vsel %vm447, %v1096, %v1094
        %v1099 = vmul.f32 %v1098, %v454
        %v1100 = vmul.f32 %v1097, %v458
        %v1101 = vmul.f32 %v1067, %v467
        %v1102 = vmul.f32 %v1068, %v471
        %1103 = vrot.lane.b32.xlu0 %v1067, 127
        %v1104 = vpop.permute.xlu0 %1103
        %1105 = vrot.lane.b32.xlu0 %v1068, 127
        %v1106 = vpop.permute.xlu0 %1105
        %v1107 = vsel %vm480, %v1104, %v1106
        %v1108 = vsel %vm480, %v1106, %v1104
        %v1109 = vmul.f32 %v1107, %v487
        %v1110 = vmul.f32 %v1108, %v491
        %1111 = vrot.lane.b32.xlu0 %v1067, 113
        %v1112 = vpop.permute.xlu0 %1111
        %1113 = vrot.lane.b32.xlu0 %v1068, 113
        %v1114 = vpop.permute.xlu0 %1113
        %v1115 = vsel %vm500, %v1112, %v1114
        %v1116 = vsel %vm500, %v1114, %v1112
        %v1117 = vmul.f32 %v1115, %v507
        %v1118 = vmul.f32 %v1116, %v511
        %1119 = vrot.lane.b32.xlu0 %v1067, 112
        %v1120 = vpop.permute.xlu0 %1119
        %1121 = vrot.lane.b32.xlu0 %v1068, 112
        %v1122 = vpop.permute.xlu0 %1121
        %v1123 = vsel %vm520, %v1120, %v1122
        %v1124 = vsel %vm520, %v1122, %v1120
        %v1125 = vmul.f32 %v1123, %v527
        %v1126 = vmul.f32 %v1124, %v531
        %1127 = vrot.lane.b32.xlu0 %v1067, 111
        %v1128 = vpop.permute.xlu0 %1127
        %1129 = vrot.lane.b32.xlu0 %v1068, 111
        %v1130 = vpop.permute.xlu0 %1129
        %v1131 = vsel %vm540, %v1128, %v1130
        %v1132 = vsel %vm540, %v1130, %v1128
        %v1133 = vmul.f32 %v1131, %v547
        %v1134 = vmul.f32 %v1132, %v551
        %1135 = vmatprep.subr.mxu0 0.0
        %1136 = vmatpush1.msra.mxu0 0.0
        %1137 = vmatprep.subr.mxu0 0.0
        %1138 = vmatpush1.msra.mxu0 0.0
        %1139 = vmatprep.subr.mxu0 0.0
        %1140 = vmatpush1.msra.mxu0 0.0
        %1141 = vmatprep.subr.mxu0 0.0
        %1142 = vmatpush1.msra.mxu0 0.0
        %1143 = vmatprep.subr.mxu0 0.0
        %1144 = vmatpush1.msra.mxu0 0.0
        %1145 = vmatprep.subr.mxu0 0.0
        %1146 = vmatpush1.msra.mxu0 0.0
        %1147 = vmatprep.subr.mxu0 0.0
        %1148 = vmatpush1.msra.mxu0 0.0
        %1149 = vmatprep.subr.mxu0 %v1134
        %1150 = vmatpush1.msra.mxu0 %v1133
        %1151 = vmatprep.subr.mxu0 %v1126
        %1152 = vmatpush1.msra.mxu0 %v1125
        %1153 = vmatprep.subr.mxu0 %v1118
        %1154 = vmatpush1.msra.mxu0 %v1117
        %1155 = vmatprep.subr.mxu0 %v1110
        %1156 = vmatpush1.msra.mxu0 %v1109
        %1157 = vmatprep.subr.mxu0 %v1102
        %1158 = vmatpush1.msra.mxu0 %v1101
        %1159 = vmatprep.subr.mxu0 %v1100
        %1160 = vmatpush1.msra.mxu0 %v1099
        %1161 = vmatprep.subr.mxu0 %v1092
        %1162 = vmatpush1.msra.mxu0 %v1091
        %1163 = vmatprep.subr.mxu0 %v1084
        %1164 = vmatpush1.msra.mxu0 %v1083
        %1165 = vmatprep.subr.mxu0 %v1076
        %1166 = vmatpush1.msra.mxu0 %v1075
        %1167 = vmatprep.subr.mxu0 0.0
        %1168 = vmatpush2.msra.mxu0 0.0
        %1169 = vmatprep.subr.mxu0 0.0
        %1170 = vmatpush2.msra.mxu0 0.0
        %1171 = vmatprep.subr.mxu0 0.0
        %1172 = vmatpush2.msra.mxu0 0.0
        %1173 = vmatprep.subr.mxu0 0.0
        %1174 = vmatpush2.msra.mxu0 0.0
        %1175 = vmatprep.subr.mxu0 0.0
        %1176 = vmatpush2.msra.mxu0 0.0
        %1177 = vmatprep.subr.mxu0 0.0
        %1178 = vmatpush2.msra.mxu0 0.0
        %1179 = vmatprep.subr.mxu0 0.0
        %1180 = vmatpush2.msra.mxu0 0.0
        %1181 = vmatprep.subr.mxu0 0.0
        %1182 = vmatpush2.msra.mxu0 0.0
        %1183 = vmatprep.subr.mxu0 0.0
        %1184 = vmatpush2.msra.mxu0 0.0
        %1185 = vmatprep.subr.mxu0 0.0
        %1186 = vmatpush2.msra.mxu0 0.0
        %1187 = vmatprep.subr.mxu0 0.0
        %1188 = vmatpush2.msra.mxu0 0.0
        %1189 = vmatprep.subr.mxu0 0.0
        %1190 = vmatpush2.msra.mxu0 0.0
        %1191 = vmatprep.subr.mxu0 0.0
        %1192 = vmatpush2.msra.mxu0 0.0
        %1193 = vmatprep.subr.mxu0 0.0
        %1194 = vmatpush2.msra.mxu0 0.0
        %1195 = vmatprep.subr.mxu0 0.0
        %1196 = vmatpush2.msra.mxu0 0.0
        %1197 = vmatprep.subr.mxu0 0.0
        %1198 = vmatpush2.msra.mxu0 0.0
        %1199 = vmatprep.mubr.f32.mxu0 0.0
        %1200 = vmatmul.mubr.f32.gmra.mxu0 %v992
        %v1201 = vpop.f32.mrf.mxu0
        %v1202 = vadd.f32 %v989, %v1201
        %v1203 = vpop.f32.mrf.mxu0
        %v1204 = vadd.f32 %v989, %v1203
        %1205 = vdwg.mxu0
        %v1206 = vmax.f32 %v1202, 0.0
        %v1207 = vmax.f32 %v1204, 0.0
        %v1208 = vadd.f32 %v918, %v1206
        %v1209 = vadd.f32 %v919, %v1207
        %1210 = vrot.lane.b32.xlu0 %v1208, 17
        %v1211 = vpop.permute.xlu0 %1210
        %1212 = vrot.lane.b32.xlu0 %v1209, 17
        %v1213 = vpop.permute.xlu0 %1212
        %v1214 = vsel %vm387, %v1211, %v1213
        %v1215 = vsel %vm387, %v1213, %v1211
        %v1216 = vmul.f32 %v1215, %v394
        %v1217 = vmul.f32 %v1214, %v398
        %1218 = vrot.lane.b32.xlu0 %v1208, 16
        %v1219 = vpop.permute.xlu0 %1218
        %1220 = vrot.lane.b32.xlu0 %v1209, 16
        %v1221 = vpop.permute.xlu0 %1220
        %v1222 = vsel %vm407, %v1219, %v1221
        %v1223 = vsel %vm407, %v1221, %v1219
        %v1224 = vmul.f32 %v1223, %v414
        %v1225 = vmul.f32 %v1222, %v418
        %1226 = vrot.lane.b32.xlu0 %v1208, 15
        %v1227 = vpop.permute.xlu0 %1226
        %1228 = vrot.lane.b32.xlu0 %v1209, 15
        %v1229 = vpop.permute.xlu0 %1228
        %v1230 = vsel %vm427, %v1227, %v1229
        %v1231 = vsel %vm427, %v1229, %v1227
        %v1232 = vmul.f32 %v1231, %v434
        %v1233 = vmul.f32 %v1230, %v438
        %1234 = vrot.lane.b32.xlu0 %v1208, 1
        %v1235 = vpop.permute.xlu0 %1234
        %1236 = vrot.lane.b32.xlu0 %v1209, 1
        %v1237 = vpop.permute.xlu0 %1236
        %v1238 = vsel %vm447, %v1235, %v1237
        %v1239 = vsel %vm447, %v1237, %v1235
        %v1240 = vmul.f32 %v1239, %v454
        %v1241 = vmul.f32 %v1238, %v458
        %v1242 = vmul.f32 %v1208, %v467
        %v1243 = vmul.f32 %v1209, %v471
        %1244 = vrot.lane.b32.xlu0 %v1208, 127
        %v1245 = vpop.permute.xlu0 %1244
        %1246 = vrot.lane.b32.xlu0 %v1209, 127
        %v1247 = vpop.permute.xlu0 %1246
        %v1248 = vsel %vm480, %v1245, %v1247
        %v1249 = vsel %vm480, %v1247, %v1245
        %v1250 = vmul.f32 %v1248, %v487
        %v1251 = vmul.f32 %v1249, %v491
        %1252 = vrot.lane.b32.xlu0 %v1208, 113
        %v1253 = vpop.permute.xlu0 %1252
        %1254 = vrot.lane.b32.xlu0 %v1209, 113
        %v1255 = vpop.permute.xlu0 %1254
        %v1256 = vsel %vm500, %v1253, %v1255
        %v1257 = vsel %vm500, %v1255, %v1253
        %v1258 = vmul.f32 %v1256, %v507
        %v1259 = vmul.f32 %v1257, %v511
        %1260 = vrot.lane.b32.xlu0 %v1208, 112
        %v1261 = vpop.permute.xlu0 %1260
        %1262 = vrot.lane.b32.xlu0 %v1209, 112
        %v1263 = vpop.permute.xlu0 %1262
        %v1264 = vsel %vm520, %v1261, %v1263
        %v1265 = vsel %vm520, %v1263, %v1261
        %v1266 = vmul.f32 %v1264, %v527
        %v1267 = vmul.f32 %v1265, %v531
        %1268 = vrot.lane.b32.xlu0 %v1208, 111
        %v1269 = vpop.permute.xlu0 %1268
        %1270 = vrot.lane.b32.xlu0 %v1209, 111
        %v1271 = vpop.permute.xlu0 %1270
        %v1272 = vsel %vm540, %v1269, %v1271
        %v1273 = vsel %vm540, %v1271, %v1269
        %v1274 = vmul.f32 %v1272, %v547
        %v1275 = vmul.f32 %v1273, %v551
        %1276 = vmatprep.subr.mxu0 0.0
        %1277 = vmatpush1.msra.mxu0 0.0
        %1278 = vmatprep.subr.mxu0 0.0
        %1279 = vmatpush1.msra.mxu0 0.0
        %1280 = vmatprep.subr.mxu0 0.0
        %1281 = vmatpush1.msra.mxu0 0.0
        %1282 = vmatprep.subr.mxu0 0.0
        %1283 = vmatpush1.msra.mxu0 0.0
        %1284 = vmatprep.subr.mxu0 0.0
        %1285 = vmatpush1.msra.mxu0 0.0
        %1286 = vmatprep.subr.mxu0 0.0
        %1287 = vmatpush1.msra.mxu0 0.0
        %1288 = vmatprep.subr.mxu0 0.0
        %1289 = vmatpush1.msra.mxu0 0.0
        %1290 = vmatprep.subr.mxu0 %v1275
        %1291 = vmatpush1.msra.mxu0 %v1274
        %1292 = vmatprep.subr.mxu0 %v1267
        %1293 = vmatpush1.msra.mxu0 %v1266
        %1294 = vmatprep.subr.mxu0 %v1259
        %1295 = vmatpush1.msra.mxu0 %v1258
        %1296 = vmatprep.subr.mxu0 %v1251
        %1297 = vmatpush1.msra.mxu0 %v1250
        %1298 = vmatprep.subr.mxu0 %v1243
        %1299 = vmatpush1.msra.mxu0 %v1242
        %1300 = vmatprep.subr.mxu0 %v1241
        %1301 = vmatpush1.msra.mxu0 %v1240
        %1302 = vmatprep.subr.mxu0 %v1233
        %1303 = vmatpush1.msra.mxu0 %v1232
        %1304 = vmatprep.subr.mxu0 %v1225
        %1305 = vmatpush1.msra.mxu0 %v1224
        %1306 = vmatprep.subr.mxu0 %v1217
        %1307 = vmatpush1.msra.mxu0 %v1216
        %1308 = vmatprep.subr.mxu0 0.0
        %1309 = vmatpush2.msra.mxu0 0.0
        %1310 = vmatprep.subr.mxu0 0.0
        %1311 = vmatpush2.msra.mxu0 0.0
        %1312 = vmatprep.subr.mxu0 0.0
        %1313 = vmatpush2.msra.mxu0 0.0
        %1314 = vmatprep.subr.mxu0 0.0
        %1315 = vmatpush2.msra.mxu0 0.0
        %1316 = vmatprep.subr.mxu0 0.0
        %1317 = vmatpush2.msra.mxu0 0.0
        %1318 = vmatprep.subr.mxu0 0.0
        %1319 = vmatpush2.msra.mxu0 0.0
        %1320 = vmatprep.subr.mxu0 0.0
        %1321 = vmatpush2.msra.mxu0 0.0
        %1322 = vmatprep.subr.mxu0 0.0
        %1323 = vmatpush2.msra.mxu0 0.0
        %1324 = vmatprep.subr.mxu0 0.0
        %1325 = vmatpush2.msra.mxu0 0.0
        %1326 = vmatprep.subr.mxu0 0.0
        %1327 = vmatpush2.msra.mxu0 0.0
        %1328 = vmatprep.subr.mxu0 0.0
        %1329 = vmatpush2.msra.mxu0 0.0
        %1330 = vmatprep.subr.mxu0 0.0
        %1331 = vmatpush2.msra.mxu0 0.0
        %1332 = vmatprep.subr.mxu0 0.0
        %1333 = vmatpush2.msra.mxu0 0.0
        %1334 = vmatprep.subr.mxu0 0.0
        %1335 = vmatpush2.msra.mxu0 0.0
        %1336 = vmatprep.subr.mxu0 0.0
        %1337 = vmatpush2.msra.mxu0 0.0
        %1338 = vmatprep.subr.mxu0 0.0
        %1339 = vmatpush2.msra.mxu0 0.0
        %1340 = vmatprep.mubr.f32.mxu0 0.0
        %1341 = vmatmul.mubr.f32.gmra.mxu0 %v992
        %v1342 = vpop.f32.mrf.mxu0
        %v1343 = vadd.f32 %v989, %v1342
        %v1344 = vpop.f32.mrf.mxu0
        %v1345 = vadd.f32 %v989, %v1344
        %1346 = vdwg.mxu0
        %v1347 = vmax.f32 %v1343, 0.0
        %v1348 = vmax.f32 %v1345, 0.0
        %v1349 = vadd.f32 %v377, %v1347
        %v1350 = vadd.f32 %v379, %v1348
        %1351 = vst [vmem:[%s260] sm:$0xff] %v1349
        %1352 = vst [vmem:[%s260 + $0x8] sm:$0xff] %v1350
        %s1353 = sand.u32 %s160, 1
        %s1354 = scalar_lea.sflag [#allocation4], %s1353
        %s1355 = sand.u32 %s160, 1
        %s1356 = smul.addr %s1355, 16
        %s1357 = scalar_lea.vmem [#allocation5], %s1356
        // Predicated region
        $region49: #{tpu_custom_call.1} parent=43 // pred_check
          %p1358 = pneg %p170
        $region50: #{tpu_custom_call.1} parent=43 // pred_check_branch
          %1360 = sbr.rel (%p1358) target = $region52
        $region51: #{tpu_custom_call.1} parent=43 // pred_region
          %s1361 = smul.u32 2, %s21
          %s1363 = ssub.s32 256, 256
          %1364 = vsyncadd %s1354, %s1363
          %s1365 = smul.addr %s1361, 128
          %s1366 = scalar_lea.hbm %s6, %s1365
          %s1368 = sshll.u32 %s1357, 4
          %s1369 = int_to_ptr.vmem [resolvable:$true] %s1368
          %1371 = dma.vmem_to_hbm [thread:$0]  %s1369, 256, %s1366, %s1354
        $region52: #{tpu_custom_call.1} parent=43 // pred_fallthru
          _
      $region44: #{tpu_custom_call.1} parent=5 // pred_fallthru
        _
      %p1372 = scmp.le.s32.totalorder 2, %s16
      // Predicated region
      $region53: #{tpu_custom_call.1} parent=5 // pred_check
        %p1373 = pneg %p1372
      $region54: #{tpu_custom_call.1} parent=5 // pred_check_branch
        %1375 = sbr.rel (%p1373) target = $region56
      $region55: #{tpu_custom_call.1} parent=5 // pred_region
        %s1376 = ssub.s32 %s16, 2
        // Predicated region
        $region57: #{tpu_custom_call.1} parent=55 // pred_check
          %p1377 = pneg %p176
        $region58: #{tpu_custom_call.1} parent=55 // pred_check_branch
          %1379 = sbr.rel (%p1377) target = $region60
        $region59: #{tpu_custom_call.1} parent=55 // pred_region
          %s1380 = sand.u32 %s161, 1
          %s1381 = scalar_lea.sflag [#allocation4], %s1380
          %s1382 = sand.u32 %s161, 1
          %s1383 = smul.addr %s1382, 16
          %s1384 = scalar_lea.vmem [#allocation5], %s1383
          %1385 = dma.done %s1381, 256
        $region60: #{tpu_custom_call.1} parent=55 // pred_fallthru
          _
      $region56: #{tpu_custom_call.1} parent=5 // pred_fallthru
        _
    $region6: #{tpu_custom_call.1} parent=1 // loop_footer
      %s20 = sadd.s32 1, %s16
    $region7: #{tpu_custom_call.1} parent=1 // loop_footer_branch
      %15 = sbr.rel target = $region3
    $region8: #{tpu_custom_call.1} parent=1 // loop_exit
      _
    %1386 = vsyncpa [#allocation3], 1
    %s1387 = scalar_lea.sflag [#allocation3], 1
    %1388 = vsyncpa %s1387, 1
    %1389 = vsyncpa [#allocation4], 1
    %s1390 = scalar_lea.sflag [#allocation4], 1
    %1391 = vsyncpa %s1390, 1

</llo_original>
